<compile_context>
chip_gen: v5e
topology: v5e:2x2
jax: 0.10.0
libtpu: 0.0.40
codegen_flags: <defaults>
</compile_context>

<pallas_src>
import functools

import jax
import jax.numpy as jnp
from jax.experimental import pallas as pl
from jax.experimental.pallas import tpu as pltpu

EPS = 1e-5
_VMEM_LIMIT = 32 * 1024 * 1024  # bytes; conservative across v5e/v6e/v7x


# ----------------------------- fused Pallas kernel --------------------------

def _conv3x3_relu_flat(v, w9, bias, mask_l, mask_r, ext_ref, patch_ref, H, W):
    """3x3 'same' conv + folded-BN bias + ReLU, channels-first spatial-on-lanes.

    v         : (c, H*W) f32, flat row-major image (lane dim = H*W).
    w9        : (c, 9c) bf16, folded weights, columns ordered (kh, kw, c_in).
    bias      : (c, 1) f32.
    mask_l/_r : (1, H*W) f32, zero out column j==0 / j==W-1 contributions.
    ext_ref   : (c, H*W + 2*ext_pad) f32 VMEM scratch, pad regions pre-zeroed.
    patch_ref : (9c, H*W) f32 VMEM scratch holding the im2col patch.
    """
    c_in, HW = v.shape
    ext_pad = (ext_ref.shape[1] - HW) // 2          # lane-aligned (multiple of 128)

    # Stage the image into the zero-extended flat buffer (aligned lane store),
    # then pull it back as a value and take 9 shifted lane slices from vregs.
    ext_ref[:, ext_pad:ext_pad + HW] = v
    ext = ext_ref[...]                              # (c, HW + 2*ext_pad)

    for kh in range(3):
        for kw in range(3):
            tap = kh * 3 + kw
            d = (kh - 1) * W + (kw - 1)             # flat-index offset of this tap
            t = ext[:, ext_pad + d:ext_pad + d + HW]
            if kw == 0:                             # left neighbour of column 0
                t = t * mask_l
            elif kw == 2:                           # right neighbour of column W-1
                t = t * mask_r
            patch_ref[tap * c_in:(tap + 1) * c_in, :] = t

    y = jnp.dot(w9, patch_ref[...].astype(jnp.bfloat16),
                preferred_element_type=jnp.float32) + bias
    return jnp.maximum(y, 0.0)


def _decoder_kernel(x_ref, w1_ref, b1_ref, wm1_ref, bm1_ref, wm2_ref, bm2_ref,
                    w2_ref, b2_ref, mask_ref, o_ref, ext_ref, patch_ref, *, H, W):
    HW = H * W
    c = ext_ref.shape[0]
    ext_pad = (ext_ref.shape[1] - HW) // 2

    # Zero only the flat-pad regions (interior is always fully overwritten);
    # done every grid step so the kernel is safe under "parallel" semantics.
    ext_ref[:, :ext_pad] = jnp.zeros((c, ext_pad), jnp.float32)
    ext_ref[:, ext_pad + HW:] = jnp.zeros((c, ext_pad), jnp.float32)

    mask = mask_ref[...]                            # (2, HW) f32
    mask_l, mask_r = mask[0:1, :], mask[1:2, :]

    # cv1: 1x1 conv + BN + ReLU in transposed form -> (2c, HW), lane-dense.
    x = x_ref[...].astype(jnp.bfloat16)             # (C1, HW)
    y = jnp.dot(w1_ref[...], x, preferred_element_type=jnp.float32) + b1_ref[...]
    y = jnp.maximum(y, 0.0)
    a, b = y[:c, :], y[c:, :]                       # channel split (sublane slice)

    # n Bottlenecks: a = a + relu(bn(conv3x3(relu(bn(conv3x3(a)))))). All in VMEM.
    n = wm1_ref.shape[0]
    for i in range(n):                              # static unroll (small n)
        h = _conv3x3_relu_flat(a, wm1_ref[i], bm1_ref[i], mask_l, mask_r,
                               ext_ref, patch_ref, H, W)
        a = a + _conv3x3_relu_flat(h, wm2_ref[i], bm2_ref[i], mask_l, mask_r,
                                   ext_ref, patch_ref, H, W)

    # cv2: 1x1 conv on concat(a, b) as two accumulating dots (concat never built).
    w2 = w2_ref[...]                                # (C2, 2c) bf16
    out = jnp.dot(w2[:, :c], a.astype(jnp.bfloat16),
                  preferred_element_type=jnp.float32)
    out = out + jnp.dot(w2[:, c:], b.astype(jnp.bfloat16),
                        preferred_element_type=jnp.float32)
    o_ref[...] = jnp.maximum(out + b2_ref[...], 0.0)


# ---------------------------- pallas_call wrapper ----------------------------

def decoder_forward_pallas(x_nchw, prep):
    """Decoder.forward: a, b = split(cv1(x)); return cv2(cat(m(a), b))."""
    B, C1, H, W = x_nchw.shape
    HW = H * W
    x = x_nchw.reshape(B, C1, HW)                   # NCHW -> channels-first flat

    w1, b1 = prep["w1"], prep["b1"]
    wm1, bm1 = prep["wm1"], prep["bm1"]
    wm2, bm2 = prep["wm2"], prep["bm2"]
    w2, b2 = prep["w2"], prep["b2"]
    masks = prep["masks"]

    twoc = w1.shape[0]
    c = twoc // 2
    C2 = w2.shape[0]
    n = wm1.shape[0]
    ext_pad = pl.cdiv(W + 1, 128) * 128             # lane-aligned zero extension

    flops = B * (2 * HW * C1 * twoc
                 + n * 2 * (2 * HW * (9 * c) * c)
                 + 2 * HW * twoc * C2)
    bytes_accessed = (x.size * 4 + B * HW * C2 * 4
                      + (w1.size + wm1.size + wm2.size + w2.size) * 2
                      + (b1.size + bm1.size + bm2.size + b2.size + masks.size) * 4)

    out = pl.pallas_call(
        functools.partial(_decoder_kernel, H=H, W=W),
        out_shape=jax.ShapeDtypeStruct((B, C2, HW), jnp.float32),
        grid=(B,),
        in_specs=[
            pl.BlockSpec((None, C1, HW), lambda b: (b, 0, 0)),        # x
            pl.BlockSpec((twoc, C1), lambda b: (0, 0)),               # cv1 W^T
            pl.BlockSpec((twoc, 1), lambda b: (0, 0)),                # cv1 bias
            pl.BlockSpec((n, c, 9 * c), lambda b: (0, 0, 0)),         # m.cv1 W^T
            pl.BlockSpec((n, c, 1), lambda b: (0, 0, 0)),             # m.cv1 bias
            pl.BlockSpec((n, c, 9 * c), lambda b: (0, 0, 0)),         # m.cv2 W^T
            pl.BlockSpec((n, c, 1), lambda b: (0, 0, 0)),             # m.cv2 bias
            pl.BlockSpec((C2, twoc), lambda b: (0, 0)),               # cv2 W^T
            pl.BlockSpec((C2, 1), lambda b: (0, 0)),                  # cv2 bias
            pl.BlockSpec((2, HW), lambda b: (0, 0)),                  # column masks
        ],
        out_specs=pl.BlockSpec((None, C2, HW), lambda b: (b, 0, 0)),
        scratch_shapes=[
            pltpu.VMEM((c, HW + 2 * ext_pad), jnp.float32),           # ext image
            pltpu.VMEM((9 * c, HW), jnp.float32),                     # im2col patch
        ],
        compiler_params=pltpu.CompilerParams(
            dimension_semantics=("parallel",),
            vmem_limit_bytes=_VMEM_LIMIT),
        cost_estimate=pl.CostEstimate(flops=flops, transcendentals=0,
                                      bytes_accessed=bytes_accessed),
    )(x, w1, b1, wm1, bm1, wm2, bm2, w2, b2, masks)
    return out.reshape(B, C2, H, W)


# ------------------------ weight prep (hoisted, once) ------------------------

def fold_conv_bn_t(p, dtype=jnp.bfloat16):
    """Fold BN (inference running stats) into conv weights, transposed layout.

    p['w'] is PyTorch OIHW.  Returns (W (O, kh*kw*I) in `dtype`, bias (O, 1) f32)
    with columns ordered (kh, kw, c_in) to match the in-kernel im2col patch."""
    w = p["w"]
    O, I, kh, kw = w.shape
    scale = p["gamma"] / jnp.sqrt(p["var"] + EPS)
    w_mat = jnp.transpose(w, (0, 2, 3, 1)).reshape(O, kh * kw * I) * scale[:, None]
    bias = (p["beta"] - p["mean"] * scale).reshape(O, 1)
    return w_mat.astype(dtype), bias.astype(jnp.float32)


def prepare_decoder_params(params, H, W):
    """Fold BN once, stack bottleneck weights, build the two column masks."""
    w1, b1 = fold_conv_bn_t(params["cv1"])           # (2c, C1)
    w2, b2 = fold_conv_bn_t(params["cv2"])           # (C2, 2c)
    wm1, bm1, wm2, bm2 = [], [], [], []
    for bp in params["m"]:
        wa, ba = fold_conv_bn_t(bp["cv1"])           # (c, 9c)
        wb, bb = fold_conv_bn_t(bp["cv2"])
        wm1.append(wa); bm1.append(ba); wm2.append(wb); bm2.append(bb)
    j = jnp.arange(H * W, dtype=jnp.int32) % W
    masks = jnp.stack([(j > 0), (j < W - 1)]).astype(jnp.float32)   # (2, HW)
    return {"w1": w1, "b1": b1, "w2": w2, "b2": b2,
            "wm1": jnp.stack(wm1), "bm1": jnp.stack(bm1),
            "wm2": jnp.stack(wm2), "bm2": jnp.stack(bm2),
            "masks": masks}


# -------------------------- init + pure-JAX reference ------------------------

def init_conv_bn(key, c_in, c_out, k):
    k1, k2, k3, k4, k5 = jax.random.split(key, 5)
    fan_in = c_in * k * k
    return dict(
        w=jax.random.normal(k1, (c_out, c_in, k, k), jnp.float32) / jnp.sqrt(fan_in),
        gamma=jax.random.uniform(k2, (c_out,), jnp.float32, 0.8, 1.2),
        beta=jax.random.normal(k3, (c_out,), jnp.float32) * 0.05,
        mean=jax.random.normal(k4, (c_out,), jnp.float32) * 0.05,
        var=jax.random.uniform(k5, (c_out,), jnp.float32, 0.8, 1.2),
    )


def init_decoder_params(key, c1, c2, n=1, e=0.5):
    c = int(c2 * e)
    keys = jax.random.split(key, 2 + 2 * n)
    params = {
        "cv1": init_conv_bn(keys[0], c1, 2 * c, 1),
        "cv2": init_conv_bn(keys[1], 2 * c, c2, 1),
        "m": [{"cv1": init_conv_bn(keys[2 + 2 * i], c, c, 3),
               "cv2": init_conv_bn(keys[3 + 2 * i], c, c, 3)} for i in range(n)],
    }
    return params, c


def _conv_bn_relu_ref(x, p, pad):
    y = jax.lax.conv_general_dilated(
        x, p["w"], window_strides=(1, 1), padding=[(pad, pad), (pad, pad)],
        dimension_numbers=("NCHW", "OIHW", "NCHW"))
    scale = (p["gamma"] / jnp.sqrt(p["var"] + EPS))
    shift = p["beta"] - p["mean"] * scale
    return jnp.maximum(y * scale[None, :, None, None]
                       + shift[None, :, None, None], 0.0)


def decoder_forward_ref(x, params, c):
    y = _conv_bn_relu_ref(x, params["cv1"], 0)
    a, b = y[:, :c], y[:, c:]
    for bp in params["m"]:
        h = _conv_bn_relu_ref(a, bp["cv1"], 1)
        a = a + _conv_bn_relu_ref(h, bp["cv2"], 1)
    return _conv_bn_relu_ref(jnp.concatenate([a, b], axis=1), params["cv2"], 0)


# --------------------------------- main --------------------------------------

if __name__ == "__main__":
    key = jax.random.PRNGKey(0)
    k_params, k_x = jax.random.split(key)

    B, C1, C2, H, W, n = 2, 8, 8, 16, 16, 1          # c = 4, H*W = 256 lanes
    params, c = init_decoder_params(k_params, C1, C2, n=n, e=0.5)

    # PyTorch-style NCHW input consumed directly (channels-first layout).
    x_nchw = jax.random.normal(k_x, (B, C1, H, W), jnp.float32)

    prep = prepare_decoder_params(params, H, W)      # hoisted BN fold + bf16 weights
    fwd = jax.jit(decoder_forward_pallas)

    out = jax.block_until_ready(fwd(x_nchw, prep))

    ref = decoder_forward_ref(x_nchw, params, c)
    assert out.shape == (B, C2, H, W), out.shape
    # bf16 matmuls (f32 accumulation) -> compare against f32 reference loosely.
    assert jnp.allclose(out, ref, atol=1e-1, rtol=1e-1), "mismatch vs reference"

    print("KERNEL_OK")
</pallas_src>

<mosaic_0001>
module attributes {stable_mosaic.version = 11 : i64} {
  func.func @_decoder_kernel(%arg0: i32, %arg1: memref<1x8x256xf32, #tpu.memory_space<vmem>>, %arg2: memref<8x8xbf16, #tpu.memory_space<vmem>>, %arg3: memref<8x1xf32, #tpu.memory_space<vmem>>, %arg4: memref<1x4x36xbf16, #tpu.memory_space<vmem>>, %arg5: memref<1x4x1xf32, #tpu.memory_space<vmem>>, %arg6: memref<1x4x36xbf16, #tpu.memory_space<vmem>>, %arg7: memref<1x4x1xf32, #tpu.memory_space<vmem>>, %arg8: memref<8x8xbf16, #tpu.memory_space<vmem>>, %arg9: memref<8x1xf32, #tpu.memory_space<vmem>>, %arg10: memref<2x256xf32, #tpu.memory_space<vmem>>, %arg11: memref<1x8x256xf32, #tpu.memory_space<vmem>>, %arg12: memref<4x512xf32, #tpu.memory_space<vmem>>, %arg13: memref<36x256xf32, #tpu.memory_space<vmem>>) attributes {dimension_semantics = [#tpu.dimension_semantics<parallel>], iteration_bounds = array<i64: 2>, scalar_prefetch = 0 : i64, scratch_operands = 2 : i64, tpu.core_type = #tpu.core_type<tc>, window_params = [{transform_indices = @transform_0, window_bounds = array<i64: 1, 8, 256>}, {pipeline_mode = #tpu.pipeline_mode<synchronous>, transform_indices = @transform_1, window_bounds = array<i64: 8, 8>}, {pipeline_mode = #tpu.pipeline_mode<synchronous>, transform_indices = @transform_2, window_bounds = array<i64: 8, 1>}, {pipeline_mode = #tpu.pipeline_mode<synchronous>, transform_indices = @transform_3, window_bounds = array<i64: 1, 4, 36>}, {pipeline_mode = #tpu.pipeline_mode<synchronous>, transform_indices = @transform_4, window_bounds = array<i64: 1, 4, 1>}, {pipeline_mode = #tpu.pipeline_mode<synchronous>, transform_indices = @transform_5, window_bounds = array<i64: 1, 4, 36>}, {pipeline_mode = #tpu.pipeline_mode<synchronous>, transform_indices = @transform_6, window_bounds = array<i64: 1, 4, 1>}, {pipeline_mode = #tpu.pipeline_mode<synchronous>, transform_indices = @transform_7, window_bounds = array<i64: 8, 8>}, {pipeline_mode = #tpu.pipeline_mode<synchronous>, transform_indices = @transform_8, window_bounds = array<i64: 8, 1>}, {pipeline_mode = #tpu.pipeline_mode<synchronous>, transform_indices = @transform_9, window_bounds = array<i64: 2, 256>}, {transform_indices = @transform_10, window_bounds = array<i64: 1, 8, 256>}]} {
    %cst = arith.constant 0.000000e+00 : f32
    %0 = vector.broadcast %cst : f32 to vector<4x128xf32>
    %c0 = arith.constant 0 : index
    %c0_0 = arith.constant 0 : index
    %1 = vector.load %arg12[%c0, %c0_0] : memref<4x512xf32, #tpu.memory_space<vmem>>, vector<4x128xf32>
    tpu.vector_store %arg12[%c0, %c0_0], %0 {strides = array<i32>} : memref<4x512xf32, #tpu.memory_space<vmem>>, vector<4x128xf32>,
    %cst_1 = arith.constant 0.000000e+00 : f32
    %2 = vector.broadcast %cst_1 : f32 to vector<4x128xf32>
    %c0_2 = arith.constant 0 : index
    %c384 = arith.constant 384 : index
    %3 = vector.load %arg12[%c0_2, %c384] : memref<4x512xf32, #tpu.memory_space<vmem>>, vector<4x128xf32>
    tpu.vector_store %arg12[%c0_2, %c384], %2 {strides = array<i32>} : memref<4x512xf32, #tpu.memory_space<vmem>>, vector<4x128xf32>,
    %c0_3 = arith.constant 0 : index
    %c0_4 = arith.constant 0 : index
    %4 = vector.load %arg10[%c0_3, %c0_4] : memref<2x256xf32, #tpu.memory_space<vmem>>, vector<2x256xf32>
    %5 = vector.extract_strided_slice %4 {offsets = [0, 0], sizes = [1, 256], strides = [1, 1]} : vector<2x256xf32> to vector<1x256xf32>
    %6 = vector.extract_strided_slice %4 {offsets = [1, 0], sizes = [1, 256], strides = [1, 1]} : vector<2x256xf32> to vector<1x256xf32>
    %c0_5 = arith.constant 0 : index
    %c0_6 = arith.constant 0 : index
    %c0_7 = arith.constant 0 : index
    %7 = vector.load %arg1[%c0_5, %c0_6, %c0_7] : memref<1x8x256xf32, #tpu.memory_space<vmem>>, vector<1x8x256xf32>
    %8 = vector.shape_cast %7 : vector<1x8x256xf32> to vector<8x256xf32>
    %9 = arith.truncf %8 : vector<8x256xf32> to vector<8x256xbf16>
    %c0_8 = arith.constant 0 : index
    %c0_9 = arith.constant 0 : index
    %10 = vector.load %arg2[%c0_8, %c0_9] : memref<8x8xbf16, #tpu.memory_space<vmem>>, vector<8x8xbf16>
    %cst_10 = arith.constant dense<0.000000e+00> : vector<8x256xf32>
    %11 = tpu.matmul %10, %9, %cst_10 {dimension_numbers = #tpu.dot_dimension_numbers<[1], [0], [0], [1], [0, 0, 1, 1], [], []>} : vector<8x8xbf16>, vector<8x256xbf16>, vector<8x256xf32> -> vector<8x256xf32>
    %c0_11 = arith.constant 0 : index
    %c0_12 = arith.constant 0 : index
    %12 = vector.load %arg3[%c0_11, %c0_12] : memref<8x1xf32, #tpu.memory_space<vmem>>, vector<8x1xf32>
    %13 = vector.broadcast %12 : vector<8x1xf32> to vector<8x256xf32>
    %14 = arith.addf %11, %13 : vector<8x256xf32>
    %cst_13 = arith.constant 0.000000e+00 : f32
    %15 = vector.broadcast %cst_13 : f32 to vector<8x256xf32>
    %16 = arith.maximumf %14, %15 : vector<8x256xf32>
    %17 = vector.extract_strided_slice %16 {offsets = [0, 0], sizes = [4, 256], strides = [1, 1]} : vector<8x256xf32> to vector<4x256xf32>
    %18 = vector.extract_strided_slice %16 {offsets = [4, 0], sizes = [4, 256], strides = [1, 1]} : vector<8x256xf32> to vector<4x256xf32>
    %c0_14 = arith.constant 0 : index
    %c0_15 = arith.constant 0 : index
    %c0_16 = arith.constant 0 : index
    %19 = vector.load %arg4[%c0_14, %c0_15, %c0_16] : memref<1x4x36xbf16, #tpu.memory_space<vmem>>, vector<1x4x36xbf16>
    %20 = vector.shape_cast %19 : vector<1x4x36xbf16> to vector<4x36xbf16>
    %c0_17 = arith.constant 0 : index
    %c0_18 = arith.constant 0 : index
    %c0_19 = arith.constant 0 : index
    %21 = vector.load %arg5[%c0_17, %c0_18, %c0_19] : memref<1x4x1xf32, #tpu.memory_space<vmem>>, vector<1x4x1xf32>
    %22 = vector.shape_cast %21 : vector<1x4x1xf32> to vector<4x1xf32>
    %c0_20 = arith.constant 0 : index
    %c128 = arith.constant 128 : index
    %23 = vector.load %arg12[%c0_20, %c128] : memref<4x512xf32, #tpu.memory_space<vmem>>, vector<4x256xf32>
    tpu.vector_store %arg12[%c0_20, %c128], %17 {strides = array<i32>} : memref<4x512xf32, #tpu.memory_space<vmem>>, vector<4x256xf32>,
    %c0_21 = arith.constant 0 : index
    %c0_22 = arith.constant 0 : index
    %24 = vector.load %arg12[%c0_21, %c0_22] : memref<4x512xf32, #tpu.memory_space<vmem>>, vector<4x512xf32>
    %25 = vector.extract_strided_slice %24 {offsets = [0, 111], sizes = [4, 256], strides = [1, 1]} : vector<4x512xf32> to vector<4x256xf32>
    %26 = vector.broadcast %5 : vector<1x256xf32> to vector<4x256xf32>
    %27 = arith.mulf %25, %26 : vector<4x256xf32>
    %c0_23 = arith.constant 0 : index
    %c0_24 = arith.constant 0 : index
    %28 = vector.load %arg13[%c0_23, %c0_24] : memref<36x256xf32, #tpu.memory_space<vmem>>, vector<4x256xf32>
    tpu.vector_store %arg13[%c0_23, %c0_24], %27 {strides = array<i32>} : memref<36x256xf32, #tpu.memory_space<vmem>>, vector<4x256xf32>,
    %29 = vector.extract_strided_slice %24 {offsets = [0, 112], sizes = [4, 256], strides = [1, 1]} : vector<4x512xf32> to vector<4x256xf32>
    %c4 = arith.constant 4 : index
    %c0_25 = arith.constant 0 : index
    %30 = vector.load %arg13[%c4, %c0_25] : memref<36x256xf32, #tpu.memory_space<vmem>>, vector<4x256xf32>
    tpu.vector_store %arg13[%c4, %c0_25], %29 {strides = array<i32>} : memref<36x256xf32, #tpu.memory_space<vmem>>, vector<4x256xf32>,
    %31 = vector.extract_strided_slice %24 {offsets = [0, 113], sizes = [4, 256], strides = [1, 1]} : vector<4x512xf32> to vector<4x256xf32>
    %32 = vector.broadcast %6 : vector<1x256xf32> to vector<4x256xf32>
    %33 = arith.mulf %31, %32 : vector<4x256xf32>
    %c8 = arith.constant 8 : index
    %c0_26 = arith.constant 0 : index
    %34 = vector.load %arg13[%c8, %c0_26] : memref<36x256xf32, #tpu.memory_space<vmem>>, vector<4x256xf32>
    tpu.vector_store %arg13[%c8, %c0_26], %33 {strides = array<i32>} : memref<36x256xf32, #tpu.memory_space<vmem>>, vector<4x256xf32>,
    %35 = vector.extract_strided_slice %24 {offsets = [0, 127], sizes = [4, 256], strides = [1, 1]} : vector<4x512xf32> to vector<4x256xf32>
    %36 = vector.broadcast %5 : vector<1x256xf32> to vector<4x256xf32>
    %37 = arith.mulf %35, %36 : vector<4x256xf32>
    %c12 = arith.constant 12 : index
    %c0_27 = arith.constant 0 : index
    %38 = vector.load %arg13[%c12, %c0_27] : memref<36x256xf32, #tpu.memory_space<vmem>>, vector<4x256xf32>
    tpu.vector_store %arg13[%c12, %c0_27], %37 {strides = array<i32>} : memref<36x256xf32, #tpu.memory_space<vmem>>, vector<4x256xf32>,
    %39 = vector.extract_strided_slice %24 {offsets = [0, 128], sizes = [4, 256], strides = [1, 1]} : vector<4x512xf32> to vector<4x256xf32>
    %c16 = arith.constant 16 : index
    %c0_28 = arith.constant 0 : index
    %40 = vector.load %arg13[%c16, %c0_28] : memref<36x256xf32, #tpu.memory_space<vmem>>, vector<4x256xf32>
    tpu.vector_store %arg13[%c16, %c0_28], %39 {strides = array<i32>} : memref<36x256xf32, #tpu.memory_space<vmem>>, vector<4x256xf32>,
    %41 = vector.extract_strided_slice %24 {offsets = [0, 129], sizes = [4, 256], strides = [1, 1]} : vector<4x512xf32> to vector<4x256xf32>
    %42 = vector.broadcast %6 : vector<1x256xf32> to vector<4x256xf32>
    %43 = arith.mulf %41, %42 : vector<4x256xf32>
    %c20 = arith.constant 20 : index
    %c0_29 = arith.constant 0 : index
    %44 = vector.load %arg13[%c20, %c0_29] : memref<36x256xf32, #tpu.memory_space<vmem>>, vector<4x256xf32>
    tpu.vector_store %arg13[%c20, %c0_29], %43 {strides = array<i32>} : memref<36x256xf32, #tpu.memory_space<vmem>>, vector<4x256xf32>,
    %45 = vector.extract_strided_slice %24 {offsets = [0, 143], sizes = [4, 256], strides = [1, 1]} : vector<4x512xf32> to vector<4x256xf32>
    %46 = vector.broadcast %5 : vector<1x256xf32> to vector<4x256xf32>
    %47 = arith.mulf %45, %46 : vector<4x256xf32>
    %c24 = arith.constant 24 : index
    %c0_30 = arith.constant 0 : index
    %48 = vector.load %arg13[%c24, %c0_30] : memref<36x256xf32, #tpu.memory_space<vmem>>, vector<4x256xf32>
    tpu.vector_store %arg13[%c24, %c0_30], %47 {strides = array<i32>} : memref<36x256xf32, #tpu.memory_space<vmem>>, vector<4x256xf32>,
    %49 = vector.extract_strided_slice %24 {offsets = [0, 144], sizes = [4, 256], strides = [1, 1]} : vector<4x512xf32> to vector<4x256xf32>
    %c28 = arith.constant 28 : index
    %c0_31 = arith.constant 0 : index
    %50 = vector.load %arg13[%c28, %c0_31] : memref<36x256xf32, #tpu.memory_space<vmem>>, vector<4x256xf32>
    tpu.vector_store %arg13[%c28, %c0_31], %49 {strides = array<i32>} : memref<36x256xf32, #tpu.memory_space<vmem>>, vector<4x256xf32>,
    %51 = vector.extract_strided_slice %24 {offsets = [0, 145], sizes = [4, 256], strides = [1, 1]} : vector<4x512xf32> to vector<4x256xf32>
    %52 = vector.broadcast %6 : vector<1x256xf32> to vector<4x256xf32>
    %53 = arith.mulf %51, %52 : vector<4x256xf32>
    %c32 = arith.constant 32 : index
    %c0_32 = arith.constant 0 : index
    %54 = vector.load %arg13[%c32, %c0_32] : memref<36x256xf32, #tpu.memory_space<vmem>>, vector<4x256xf32>
    tpu.vector_store %arg13[%c32, %c0_32], %53 {strides = array<i32>} : memref<36x256xf32, #tpu.memory_space<vmem>>, vector<4x256xf32>,
    %c0_33 = arith.constant 0 : index
    %c0_34 = arith.constant 0 : index
    %55 = vector.load %arg13[%c0_33, %c0_34] : memref<36x256xf32, #tpu.memory_space<vmem>>, vector<36x256xf32>
    %56 = arith.truncf %55 : vector<36x256xf32> to vector<36x256xbf16>
    %cst_35 = arith.constant dense<0.000000e+00> : vector<4x256xf32>
    %57 = tpu.matmul %20, %56, %cst_35 {dimension_numbers = #tpu.dot_dimension_numbers<[1], [0], [0], [1], [0, 0, 1, 1], [], []>} : vector<4x36xbf16>, vector<36x256xbf16>, vector<4x256xf32> -> vector<4x256xf32>
    %58 = vector.broadcast %22 : vector<4x1xf32> to vector<4x256xf32>
    %59 = arith.addf %57, %58 : vector<4x256xf32>
    %cst_36 = arith.constant 0.000000e+00 : f32
    %60 = vector.broadcast %cst_36 : f32 to vector<4x256xf32>
    %61 = arith.maximumf %59, %60 : vector<4x256xf32>
    %c0_37 = arith.constant 0 : index
    %c0_38 = arith.constant 0 : index
    %c0_39 = arith.constant 0 : index
    %62 = vector.load %arg6[%c0_37, %c0_38, %c0_39] : memref<1x4x36xbf16, #tpu.memory_space<vmem>>, vector<1x4x36xbf16>
    %63 = vector.shape_cast %62 : vector<1x4x36xbf16> to vector<4x36xbf16>
    %c0_40 = arith.constant 0 : index
    %c0_41 = arith.constant 0 : index
    %c0_42 = arith.constant 0 : index
    %64 = vector.load %arg7[%c0_40, %c0_41, %c0_42] : memref<1x4x1xf32, #tpu.memory_space<vmem>>, vector<1x4x1xf32>
    %65 = vector.shape_cast %64 : vector<1x4x1xf32> to vector<4x1xf32>
    %c0_43 = arith.constant 0 : index
    %c128_44 = arith.constant 128 : index
    %66 = vector.load %arg12[%c0_43, %c128_44] : memref<4x512xf32, #tpu.memory_space<vmem>>, vector<4x256xf32>
    tpu.vector_store %arg12[%c0_43, %c128_44], %61 {strides = array<i32>} : memref<4x512xf32, #tpu.memory_space<vmem>>, vector<4x256xf32>,
    %c0_45 = arith.constant 0 : index
    %c0_46 = arith.constant 0 : index
    %67 = vector.load %arg12[%c0_45, %c0_46] : memref<4x512xf32, #tpu.memory_space<vmem>>, vector<4x512xf32>
    %68 = vector.extract_strided_slice %67 {offsets = [0, 111], sizes = [4, 256], strides = [1, 1]} : vector<4x512xf32> to vector<4x256xf32>
    %69 = vector.broadcast %5 : vector<1x256xf32> to vector<4x256xf32>
    %70 = arith.mulf %68, %69 : vector<4x256xf32>
    %c0_47 = arith.constant 0 : index
    %c0_48 = arith.constant 0 : index
    %71 = vector.load %arg13[%c0_47, %c0_48] : memref<36x256xf32, #tpu.memory_space<vmem>>, vector<4x256xf32>
    tpu.vector_store %arg13[%c0_47, %c0_48], %70 {strides = array<i32>} : memref<36x256xf32, #tpu.memory_space<vmem>>, vector<4x256xf32>,
    %72 = vector.extract_strided_slice %67 {offsets = [0, 112], sizes = [4, 256], strides = [1, 1]} : vector<4x512xf32> to vector<4x256xf32>
    %c4_49 = arith.constant 4 : index
    %c0_50 = arith.constant 0 : index
    %73 = vector.load %arg13[%c4_49, %c0_50] : memref<36x256xf32, #tpu.memory_space<vmem>>, vector<4x256xf32>
    tpu.vector_store %arg13[%c4_49, %c0_50], %72 {strides = array<i32>} : memref<36x256xf32, #tpu.memory_space<vmem>>, vector<4x256xf32>,
    %74 = vector.extract_strided_slice %67 {offsets = [0, 113], sizes = [4, 256], strides = [1, 1]} : vector<4x512xf32> to vector<4x256xf32>
    %75 = vector.broadcast %6 : vector<1x256xf32> to vector<4x256xf32>
    %76 = arith.mulf %74, %75 : vector<4x256xf32>
    %c8_51 = arith.constant 8 : index
    %c0_52 = arith.constant 0 : index
    %77 = vector.load %arg13[%c8_51, %c0_52] : memref<36x256xf32, #tpu.memory_space<vmem>>, vector<4x256xf32>
    tpu.vector_store %arg13[%c8_51, %c0_52], %76 {strides = array<i32>} : memref<36x256xf32, #tpu.memory_space<vmem>>, vector<4x256xf32>,
    %78 = vector.extract_strided_slice %67 {offsets = [0, 127], sizes = [4, 256], strides = [1, 1]} : vector<4x512xf32> to vector<4x256xf32>
    %79 = vector.broadcast %5 : vector<1x256xf32> to vector<4x256xf32>
    %80 = arith.mulf %78, %79 : vector<4x256xf32>
    %c12_53 = arith.constant 12 : index
    %c0_54 = arith.constant 0 : index
    %81 = vector.load %arg13[%c12_53, %c0_54] : memref<36x256xf32, #tpu.memory_space<vmem>>, vector<4x256xf32>
    tpu.vector_store %arg13[%c12_53, %c0_54], %80 {strides = array<i32>} : memref<36x256xf32, #tpu.memory_space<vmem>>, vector<4x256xf32>,
    %82 = vector.extract_strided_slice %67 {offsets = [0, 128], sizes = [4, 256], strides = [1, 1]} : vector<4x512xf32> to vector<4x256xf32>
    %c16_55 = arith.constant 16 : index
    %c0_56 = arith.constant 0 : index
    %83 = vector.load %arg13[%c16_55, %c0_56] : memref<36x256xf32, #tpu.memory_space<vmem>>, vector<4x256xf32>
    tpu.vector_store %arg13[%c16_55, %c0_56], %82 {strides = array<i32>} : memref<36x256xf32, #tpu.memory_space<vmem>>, vector<4x256xf32>,
    %84 = vector.extract_strided_slice %67 {offsets = [0, 129], sizes = [4, 256], strides = [1, 1]} : vector<4x512xf32> to vector<4x256xf32>
    %85 = vector.broadcast %6 : vector<1x256xf32> to vector<4x256xf32>
    %86 = arith.mulf %84, %85 : vector<4x256xf32>
    %c20_57 = arith.constant 20 : index
    %c0_58 = arith.constant 0 : index
    %87 = vector.load %arg13[%c20_57, %c0_58] : memref<36x256xf32, #tpu.memory_space<vmem>>, vector<4x256xf32>
    tpu.vector_store %arg13[%c20_57, %c0_58], %86 {strides = array<i32>} : memref<36x256xf32, #tpu.memory_space<vmem>>, vector<4x256xf32>,
    %88 = vector.extract_strided_slice %67 {offsets = [0, 143], sizes = [4, 256], strides = [1, 1]} : vector<4x512xf32> to vector<4x256xf32>
    %89 = vector.broadcast %5 : vector<1x256xf32> to vector<4x256xf32>
    %90 = arith.mulf %88, %89 : vector<4x256xf32>
    %c24_59 = arith.constant 24 : index
    %c0_60 = arith.constant 0 : index
    %91 = vector.load %arg13[%c24_59, %c0_60] : memref<36x256xf32, #tpu.memory_space<vmem>>, vector<4x256xf32>
    tpu.vector_store %arg13[%c24_59, %c0_60], %90 {strides = array<i32>} : memref<36x256xf32, #tpu.memory_space<vmem>>, vector<4x256xf32>,
    %92 = vector.extract_strided_slice %67 {offsets = [0, 144], sizes = [4, 256], strides = [1, 1]} : vector<4x512xf32> to vector<4x256xf32>
    %c28_61 = arith.constant 28 : index
    %c0_62 = arith.constant 0 : index
    %93 = vector.load %arg13[%c28_61, %c0_62] : memref<36x256xf32, #tpu.memory_space<vmem>>, vector<4x256xf32>
    tpu.vector_store %arg13[%c28_61, %c0_62], %92 {strides = array<i32>} : memref<36x256xf32, #tpu.memory_space<vmem>>, vector<4x256xf32>,
    %94 = vector.extract_strided_slice %67 {offsets = [0, 145], sizes = [4, 256], strides = [1, 1]} : vector<4x512xf32> to vector<4x256xf32>
    %95 = vector.broadcast %6 : vector<1x256xf32> to vector<4x256xf32>
    %96 = arith.mulf %94, %95 : vector<4x256xf32>
    %c32_63 = arith.constant 32 : index
    %c0_64 = arith.constant 0 : index
    %97 = vector.load %arg13[%c32_63, %c0_64] : memref<36x256xf32, #tpu.memory_space<vmem>>, vector<4x256xf32>
    tpu.vector_store %arg13[%c32_63, %c0_64], %96 {strides = array<i32>} : memref<36x256xf32, #tpu.memory_space<vmem>>, vector<4x256xf32>,
    %c0_65 = arith.constant 0 : index
    %c0_66 = arith.constant 0 : index
    %98 = vector.load %arg13[%c0_65, %c0_66] : memref<36x256xf32, #tpu.memory_space<vmem>>, vector<36x256xf32>
    %99 = arith.truncf %98 : vector<36x256xf32> to vector<36x256xbf16>
    %cst_67 = arith.constant dense<0.000000e+00> : vector<4x256xf32>
    %100 = tpu.matmul %63, %99, %cst_67 {dimension_numbers = #tpu.dot_dimension_numbers<[1], [0], [0], [1], [0, 0, 1, 1], [], []>} : vector<4x36xbf16>, vector<36x256xbf16>, vector<4x256xf32> -> vector<4x256xf32>
    %101 = vector.broadcast %65 : vector<4x1xf32> to vector<4x256xf32>
    %102 = arith.addf %100, %101 : vector<4x256xf32>
    %cst_68 = arith.constant 0.000000e+00 : f32
    %103 = vector.broadcast %cst_68 : f32 to vector<4x256xf32>
    %104 = arith.maximumf %102, %103 : vector<4x256xf32>
    %105 = arith.addf %17, %104 : vector<4x256xf32>
    %c0_69 = arith.constant 0 : index
    %c0_70 = arith.constant 0 : index
    %106 = vector.load %arg8[%c0_69, %c0_70] : memref<8x8xbf16, #tpu.memory_space<vmem>>, vector<8x8xbf16>
    %107 = vector.extract_strided_slice %106 {offsets = [0, 0], sizes = [8, 4], strides = [1, 1]} : vector<8x8xbf16> to vector<8x4xbf16>
    %108 = arith.truncf %105 : vector<4x256xf32> to vector<4x256xbf16>
    %cst_71 = arith.constant dense<0.000000e+00> : vector<8x256xf32>
    %109 = tpu.matmul %107, %108, %cst_71 {dimension_numbers = #tpu.dot_dimension_numbers<[1], [0], [0], [1], [0, 0, 1, 1], [], []>} : vector<8x4xbf16>, vector<4x256xbf16>, vector<8x256xf32> -> vector<8x256xf32>
    %110 = vector.extract_strided_slice %106 {offsets = [0, 4], sizes = [8, 4], strides = [1, 1]} : vector<8x8xbf16> to vector<8x4xbf16>
    %111 = arith.truncf %18 : vector<4x256xf32> to vector<4x256xbf16>
    %cst_72 = arith.constant dense<0.000000e+00> : vector<8x256xf32>
    %112 = tpu.matmul %110, %111, %cst_72 {dimension_numbers = #tpu.dot_dimension_numbers<[1], [0], [0], [1], [0, 0, 1, 1], [], []>} : vector<8x4xbf16>, vector<4x256xbf16>, vector<8x256xf32> -> vector<8x256xf32>
    %113 = arith.addf %109, %112 : vector<8x256xf32>
    %c0_73 = arith.constant 0 : index
    %c0_74 = arith.constant 0 : index
    %114 = vector.load %arg9[%c0_73, %c0_74] : memref<8x1xf32, #tpu.memory_space<vmem>>, vector<8x1xf32>
    %115 = vector.broadcast %114 : vector<8x1xf32> to vector<8x256xf32>
    %116 = arith.addf %113, %115 : vector<8x256xf32>
    %cst_75 = arith.constant 0.000000e+00 : f32
    %117 = vector.broadcast %cst_75 : f32 to vector<8x256xf32>
    %118 = arith.maximumf %116, %117 : vector<8x256xf32>
    %c0_76 = arith.constant 0 : index
    %c0_77 = arith.constant 0 : index
    %c0_78 = arith.constant 0 : index
    %119 = vector.load %arg11[%c0_76, %c0_77, %c0_78] : memref<1x8x256xf32, #tpu.memory_space<vmem>>, vector<1x8x256xf32>
    %120 = vector.shape_cast %119 : vector<1x8x256xf32> to vector<8x256xf32>
    %121 = vector.shape_cast %118 : vector<8x256xf32> to vector<1x8x256xf32>
    tpu.vector_store %arg11[%c0_76, %c0_77, %c0_78], %121 {strides = array<i32>} : memref<1x8x256xf32, #tpu.memory_space<vmem>>, vector<1x8x256xf32>,
    return
  }
  func.func @transform_0(%arg0: i32) -> (i32, i32, i32) {
    %c0_i32 = arith.constant 0 : i32
    %c0_i32_0 = arith.constant 0 : i32
    %c0_i32_1 = arith.constant 0 : i32
    return %arg0, %c0_i32, %c0_i32_0 : i32, i32, i32
  }
  func.func @transform_1(%arg0: i32) -> (i32, i32) {
    %c0_i32 = arith.constant 0 : i32
    %c0_i32_0 = arith.constant 0 : i32
    %c0_i32_1 = arith.constant 0 : i32
    return %c0_i32, %c0_i32_0 : i32, i32
  }
  func.func @transform_2(%arg0: i32) -> (i32, i32) {
    %c0_i32 = arith.constant 0 : i32
    %c0_i32_0 = arith.constant 0 : i32
    %c0_i32_1 = arith.constant 0 : i32
    return %c0_i32, %c0_i32_0 : i32, i32
  }
  func.func @transform_3(%arg0: i32) -> (i32, i32, i32) {
    %c0_i32 = arith.constant 0 : i32
    %c0_i32_0 = arith.constant 0 : i32
    %c0_i32_1 = arith.constant 0 : i32
    %c0_i32_2 = arith.constant 0 : i32
    return %c0_i32, %c0_i32_0, %c0_i32_1 : i32, i32, i32
  }
  func.func @transform_4(%arg0: i32) -> (i32, i32, i32) {
    %c0_i32 = arith.constant 0 : i32
    %c0_i32_0 = arith.constant 0 : i32
    %c0_i32_1 = arith.constant 0 : i32
    %c0_i32_2 = arith.constant 0 : i32
    return %c0_i32, %c0_i32_0, %c0_i32_1 : i32, i32, i32
  }
  func.func @transform_5(%arg0: i32) -> (i32, i32, i32) {
    %c0_i32 = arith.constant 0 : i32
    %c0_i32_0 = arith.constant 0 : i32
    %c0_i32_1 = arith.constant 0 : i32
    %c0_i32_2 = arith.constant 0 : i32
    return %c0_i32, %c0_i32_0, %c0_i32_1 : i32, i32, i32
  }
  func.func @transform_6(%arg0: i32) -> (i32, i32, i32) {
    %c0_i32 = arith.constant 0 : i32
    %c0_i32_0 = arith.constant 0 : i32
    %c0_i32_1 = arith.constant 0 : i32
    %c0_i32_2 = arith.constant 0 : i32
    return %c0_i32, %c0_i32_0, %c0_i32_1 : i32, i32, i32
  }
  func.func @transform_7(%arg0: i32) -> (i32, i32) {
    %c0_i32 = arith.constant 0 : i32
    %c0_i32_0 = arith.constant 0 : i32
    %c0_i32_1 = arith.constant 0 : i32
    return %c0_i32, %c0_i32_0 : i32, i32
  }
  func.func @transform_8(%arg0: i32) -> (i32, i32) {
    %c0_i32 = arith.constant 0 : i32
    %c0_i32_0 = arith.constant 0 : i32
    %c0_i32_1 = arith.constant 0 : i32
    return %c0_i32, %c0_i32_0 : i32, i32
  }
  func.func @transform_9(%arg0: i32) -> (i32, i32) {
    %c0_i32 = arith.constant 0 : i32
    %c0_i32_0 = arith.constant 0 : i32
    %c0_i32_1 = arith.constant 0 : i32
    return %c0_i32, %c0_i32_0 : i32, i32
  }
  func.func @transform_10(%arg0: i32) -> (i32, i32, i32) {
    %c0_i32 = arith.constant 0 : i32
    %c0_i32_0 = arith.constant 0 : i32
    %c0_i32_1 = arith.constant 0 : i32
    return %arg0, %c0_i32, %c0_i32_0 : i32, i32, i32
  }
}

</mosaic_0001>

<llo_original>
// kernel: decoder_forward_pallas.1
$region0: #{decoder_forward_pallas.1}
  #allocation0 [shape = 'u32[]', space=smem, size = 0x4, offset = 0x4, fixed_abs, tag = 'smem constant byte address 0x4 - core index']
  #allocation1 [shape = 'u32[72,128]{1,0:T(1,128)}', space=vmem, size = 0x9000, scoped, tag = 'internal scratch']
  #allocation2 [shape = 'f32[4,512]{1,0:T(4,128)}', space=vmem, size = 0x2000, scoped, tag = 'scratch operand']
  #allocation3 [shape = 'f32[36,256]{1,0:T(8,128)}', space=vmem, size = 0xa000, scoped, tag = 'scratch operand']
  %s0 = inlined_call_operand.vmem [shape: f32[2,8,256], index: 0, kind: input, shape index: {}]
  %s1 = inlined_call_operand.vmem [shape: bf16[8,8], index: 1, kind: input, shape index: {}]
  %s2 = inlined_call_operand.vmem [shape: f32[8,1], index: 2, kind: input, shape index: {}]
  %s3 = inlined_call_operand.vmem [shape: bf16[1,4,36], index: 3, kind: input, shape index: {}]
  %s4 = inlined_call_operand.vmem [shape: f32[1,4,1], index: 4, kind: input, shape index: {}]
  %s5 = inlined_call_operand.vmem [shape: bf16[1,4,36], index: 5, kind: input, shape index: {}]
  %s6 = inlined_call_operand.vmem [shape: f32[1,4,1], index: 6, kind: input, shape index: {}]
  %s7 = inlined_call_operand.vmem [shape: bf16[8,8], index: 7, kind: input, shape index: {}]
  %s8 = inlined_call_operand.vmem [shape: f32[8,1], index: 8, kind: input, shape index: {}]
  %s9 = inlined_call_operand.vmem [shape: f32[2,256], index: 9, kind: input, shape index: {}]
  %s10 = inlined_call_operand.vmem [shape: f32[2,8,256], index: 10, kind: output, shape index: {}]
  %s11 = sld [smem:[#allocation0]]
  $region73: #{decoder_forward_pallas.1} parent=0
    _
  %s13 = ssub.s32 1, %s11
  %s14 = scalar_select 0, %s13, %s11
  loop: start=0, step=1, limit=4
  $region2: #{decoder_forward_pallas.1} parent=0 // loop_pre_header
    _
  $region3: #{decoder_forward_pallas.1} parent=0 // loop_header
    %s16 = sphi 0, %s20
    %p17 = scmp.ge.s32.totalorder %s16, 4
    %s26 = sphi 0, %s28
    %s29 = sphi 0, %s26
    %s30 = sphi 0, %s29
    %s46 = sphi 0, %s30
    %s50 = sphi 0, %s50
    %s52 = sphi 0, %s50
    %s53 = sphi 0, %s52
    %s67 = sphi 0, %s53
    %s71 = sphi 0, %s71
    %s73 = sphi 0, %s71
    %s74 = sphi 0, %s73
    %s88 = sphi 0, %s74
    %s92 = sphi 0, %s92
    %s94 = sphi 0, %s92
    %s95 = sphi 0, %s94
    %s109 = sphi 0, %s95
    %s113 = sphi 0, %s113
    %s115 = sphi 0, %s113
    %s116 = sphi 0, %s115
    %s130 = sphi 0, %s116
    %s134 = sphi 0, %s134
    %s136 = sphi 0, %s134
    %s137 = sphi 0, %s136
    %s151 = sphi 0, %s137
    %s155 = sphi 0, %s155
    %s157 = sphi 0, %s155
    %s158 = sphi 0, %s157
    %s172 = sphi 0, %s158
    %s176 = sphi 0, %s176
    %s178 = sphi 0, %s176
    %s179 = sphi 0, %s178
    %s193 = sphi 0, %s179
    %s197 = sphi 0, %s197
    %s199 = sphi 0, %s197
    %s200 = sphi 0, %s199
    %s214 = sphi 0, %s200
    %s218 = sphi 0, %s218
    %s220 = sphi 0, %s218
    %s221 = sphi 0, %s220
    %s235 = sphi 0, %s221
    %s241 = sphi 0, %s243
    %s244 = sphi 0, %s241
    %s245 = sphi 0, %s244
    %s261 = sphi 0, %s245
  $region4: #{decoder_forward_pallas.1} parent=0 // loop_header_branch
    %19 = sbr.rel (%p17) target = $region8
  $region5: #{decoder_forward_pallas.1} parent=0 // loop_body
    %s21 = ssub.s32 %s16, 1
    %s22 = ssub.s32 %s16, 2
    %s23 = sadd.s32 %s16, 1
    %s24 = ssub.s32 %s16, %s23
    %p25 = scmp.eq.s32.totalorder %s24, 0
    %s27 = sadd.s32 %s26, 1
    %s28 = scalar_select %p25, %s26, %s27
    %p31 = pneg %p25
    %p32 = scmp.eq.s32.totalorder %s16, 1
    %p33 = por %p31, %p32
    %p34 = scmp.ne.s32.totalorder %s26, %s29
    %p35 = scmp.eq.s32.totalorder %s16, 0
    %p36 = por %p34, %p35
    %p37 = scmp.ne.s32.totalorder %s26, %s29
    %p38 = scmp.eq.s32.totalorder %s21, 1
    %p39 = por %p37, %p38
    %p40 = scmp.ne.s32.totalorder %s29, %s30
    %p41 = scmp.eq.s32.totalorder %s21, 0
    %p42 = por %p40, %p41
    %p43 = scmp.ne.s32.totalorder %s29, %s30
    %p44 = scmp.eq.s32.totalorder %s22, 1
    %p45 = por %p43, %p44
    %p47 = scmp.ne.s32.totalorder %s30, %s46
    %p48 = scmp.eq.s32.totalorder %s22, 0
    %p49 = por %p47, %p48
    %s51 = sadd.s32 %s50, 1
    %p54 = scmp.eq.s32.totalorder %s16, 1
    %p55 = scmp.ne.s32.totalorder %s50, %s52
    %p56 = scmp.eq.s32.totalorder %s16, 0
    %p57 = por %p55, %p56
    %p58 = scmp.ne.s32.totalorder %s50, %s52
    %p59 = scmp.eq.s32.totalorder %s21, 1
    %p60 = por %p58, %p59
    %p61 = scmp.ne.s32.totalorder %s52, %s53
    %p62 = scmp.eq.s32.totalorder %s21, 0
    %p63 = por %p61, %p62
    %p64 = scmp.ne.s32.totalorder %s52, %s53
    %p65 = scmp.eq.s32.totalorder %s22, 1
    %p66 = por %p64, %p65
    %p68 = scmp.ne.s32.totalorder %s53, %s67
    %p69 = scmp.eq.s32.totalorder %s22, 0
    %p70 = por %p68, %p69
    %s72 = sadd.s32 %s71, 1
    %p75 = scmp.eq.s32.totalorder %s16, 1
    %p76 = scmp.ne.s32.totalorder %s71, %s73
    %p77 = scmp.eq.s32.totalorder %s16, 0
    %p78 = por %p76, %p77
    %p79 = scmp.ne.s32.totalorder %s71, %s73
    %p80 = scmp.eq.s32.totalorder %s21, 1
    %p81 = por %p79, %p80
    %p82 = scmp.ne.s32.totalorder %s73, %s74
    %p83 = scmp.eq.s32.totalorder %s21, 0
    %p84 = por %p82, %p83
    %p85 = scmp.ne.s32.totalorder %s73, %s74
    %p86 = scmp.eq.s32.totalorder %s22, 1
    %p87 = por %p85, %p86
    %p89 = scmp.ne.s32.totalorder %s74, %s88
    %p90 = scmp.eq.s32.totalorder %s22, 0
    %p91 = por %p89, %p90
    %s93 = sadd.s32 %s92, 1
    %p96 = scmp.eq.s32.totalorder %s16, 1
    %p97 = scmp.ne.s32.totalorder %s92, %s94
    %p98 = scmp.eq.s32.totalorder %s16, 0
    %p99 = por %p97, %p98
    %p100 = scmp.ne.s32.totalorder %s92, %s94
    %p101 = scmp.eq.s32.totalorder %s21, 1
    %p102 = por %p100, %p101
    %p103 = scmp.ne.s32.totalorder %s94, %s95
    %p104 = scmp.eq.s32.totalorder %s21, 0
    %p105 = por %p103, %p104
    %p106 = scmp.ne.s32.totalorder %s94, %s95
    %p107 = scmp.eq.s32.totalorder %s22, 1
    %p108 = por %p106, %p107
    %p110 = scmp.ne.s32.totalorder %s95, %s109
    %p111 = scmp.eq.s32.totalorder %s22, 0
    %p112 = por %p110, %p111
    %s114 = sadd.s32 %s113, 1
    %p117 = scmp.eq.s32.totalorder %s16, 1
    %p118 = scmp.ne.s32.totalorder %s113, %s115
    %p119 = scmp.eq.s32.totalorder %s16, 0
    %p120 = por %p118, %p119
    %p121 = scmp.ne.s32.totalorder %s113, %s115
    %p122 = scmp.eq.s32.totalorder %s21, 1
    %p123 = por %p121, %p122
    %p124 = scmp.ne.s32.totalorder %s115, %s116
    %p125 = scmp.eq.s32.totalorder %s21, 0
    %p126 = por %p124, %p125
    %p127 = scmp.ne.s32.totalorder %s115, %s116
    %p128 = scmp.eq.s32.totalorder %s22, 1
    %p129 = por %p127, %p128
    %p131 = scmp.ne.s32.totalorder %s116, %s130
    %p132 = scmp.eq.s32.totalorder %s22, 0
    %p133 = por %p131, %p132
    %s135 = sadd.s32 %s134, 1
    %p138 = scmp.eq.s32.totalorder %s16, 1
    %p139 = scmp.ne.s32.totalorder %s134, %s136
    %p140 = scmp.eq.s32.totalorder %s16, 0
    %p141 = por %p139, %p140
    %p142 = scmp.ne.s32.totalorder %s134, %s136
    %p143 = scmp.eq.s32.totalorder %s21, 1
    %p144 = por %p142, %p143
    %p145 = scmp.ne.s32.totalorder %s136, %s137
    %p146 = scmp.eq.s32.totalorder %s21, 0
    %p147 = por %p145, %p146
    %p148 = scmp.ne.s32.totalorder %s136, %s137
    %p149 = scmp.eq.s32.totalorder %s22, 1
    %p150 = por %p148, %p149
    %p152 = scmp.ne.s32.totalorder %s137, %s151
    %p153 = scmp.eq.s32.totalorder %s22, 0
    %p154 = por %p152, %p153
    %s156 = sadd.s32 %s155, 1
    %p159 = scmp.eq.s32.totalorder %s16, 1
    %p160 = scmp.ne.s32.totalorder %s155, %s157
    %p161 = scmp.eq.s32.totalorder %s16, 0
    %p162 = por %p160, %p161
    %p163 = scmp.ne.s32.totalorder %s155, %s157
    %p164 = scmp.eq.s32.totalorder %s21, 1
    %p165 = por %p163, %p164
    %p166 = scmp.ne.s32.totalorder %s157, %s158
    %p167 = scmp.eq.s32.totalorder %s21, 0
    %p168 = por %p166, %p167
    %p169 = scmp.ne.s32.totalorder %s157, %s158
    %p170 = scmp.eq.s32.totalorder %s22, 1
    %p171 = por %p169, %p170
    %p173 = scmp.ne.s32.totalorder %s158, %s172
    %p174 = scmp.eq.s32.totalorder %s22, 0
    %p175 = por %p173, %p174
    %s177 = sadd.s32 %s176, 1
    %p180 = scmp.eq.s32.totalorder %s16, 1
    %p181 = scmp.ne.s32.totalorder %s176, %s178
    %p182 = scmp.eq.s32.totalorder %s16, 0
    %p183 = por %p181, %p182
    %p184 = scmp.ne.s32.totalorder %s176, %s178
    %p185 = scmp.eq.s32.totalorder %s21, 1
    %p186 = por %p184, %p185
    %p187 = scmp.ne.s32.totalorder %s178, %s179
    %p188 = scmp.eq.s32.totalorder %s21, 0
    %p189 = por %p187, %p188
    %p190 = scmp.ne.s32.totalorder %s178, %s179
    %p191 = scmp.eq.s32.totalorder %s22, 1
    %p192 = por %p190, %p191
    %p194 = scmp.ne.s32.totalorder %s179, %s193
    %p195 = scmp.eq.s32.totalorder %s22, 0
    %p196 = por %p194, %p195
    %s198 = sadd.s32 %s197, 1
    %p201 = scmp.eq.s32.totalorder %s16, 1
    %p202 = scmp.ne.s32.totalorder %s197, %s199
    %p203 = scmp.eq.s32.totalorder %s16, 0
    %p204 = por %p202, %p203
    %p205 = scmp.ne.s32.totalorder %s197, %s199
    %p206 = scmp.eq.s32.totalorder %s21, 1
    %p207 = por %p205, %p206
    %p208 = scmp.ne.s32.totalorder %s199, %s200
    %p209 = scmp.eq.s32.totalorder %s21, 0
    %p210 = por %p208, %p209
    %p211 = scmp.ne.s32.totalorder %s199, %s200
    %p212 = scmp.eq.s32.totalorder %s22, 1
    %p213 = por %p211, %p212
    %p215 = scmp.ne.s32.totalorder %s200, %s214
    %p216 = scmp.eq.s32.totalorder %s22, 0
    %p217 = por %p215, %p216
    %s219 = sadd.s32 %s218, 1
    %p222 = scmp.eq.s32.totalorder %s16, 1
    %p223 = scmp.ne.s32.totalorder %s218, %s220
    %p224 = scmp.eq.s32.totalorder %s16, 0
    %p225 = por %p223, %p224
    %p226 = scmp.ne.s32.totalorder %s218, %s220
    %p227 = scmp.eq.s32.totalorder %s21, 1
    %p228 = por %p226, %p227
    %p229 = scmp.ne.s32.totalorder %s220, %s221
    %p230 = scmp.eq.s32.totalorder %s21, 0
    %p231 = por %p229, %p230
    %p232 = scmp.ne.s32.totalorder %s220, %s221
    %p233 = scmp.eq.s32.totalorder %s22, 1
    %p234 = por %p232, %p233
    %p236 = scmp.ne.s32.totalorder %s221, %s235
    %p237 = scmp.eq.s32.totalorder %s22, 0
    %p238 = por %p236, %p237
    %s239 = ssub.s32 %s16, %s23
    %p240 = scmp.eq.s32.totalorder %s239, 0
    %s242 = sadd.s32 %s241, 1
    %s243 = scalar_select %p240, %s241, %s242
    %p246 = pneg %p240
    %p247 = scmp.eq.s32.totalorder %s16, 1
    %p248 = por %p246, %p247
    %p249 = scmp.ne.s32.totalorder %s241, %s244
    %p250 = scmp.eq.s32.totalorder %s16, 0
    %p251 = por %p249, %p250
    %p252 = scmp.ne.s32.totalorder %s241, %s244
    %p253 = scmp.eq.s32.totalorder %s21, 1
    %p254 = por %p252, %p253
    %p255 = scmp.ne.s32.totalorder %s244, %s245
    %p256 = scmp.eq.s32.totalorder %s21, 0
    %p257 = por %p255, %p256
    %p258 = scmp.ne.s32.totalorder %s244, %s245
    %p259 = scmp.eq.s32.totalorder %s22, 1
    %p260 = por %p258, %p259
    %p262 = scmp.ne.s32.totalorder %s245, %s261
    %p263 = scmp.eq.s32.totalorder %s22, 0
    %p264 = por %p262, %p263
    %p265 = scmp.le.s32.totalorder 1, %s16
    %p266 = scmp.lt.s32.totalorder %s16, 3
    %p267 = pnand %p265, %p266
    %p268 = pneg %p267
    // Predicated region
    $region9: #{decoder_forward_pallas.1} parent=5 // pred_check
      _
    $region10: #{decoder_forward_pallas.1} parent=5 // pred_check_branch
      %270 = sbr.rel (%p267) target = $region12
    $region11: #{decoder_forward_pallas.1} parent=5 // pred_region
      %s271 = ssub.s32 %s16, 1
      // Predicated region
      $region13: #{decoder_forward_pallas.1} parent=11 // pred_check
        %p272 = pneg %p63
      $region14: #{decoder_forward_pallas.1} parent=11 // pred_check_branch
        %274 = sbr.rel (%p272) target = $region16
      $region15: #{decoder_forward_pallas.1} parent=11 // pred_region
        _
      $region16: #{decoder_forward_pallas.1} parent=11 // pred_fallthru
        _
      // Predicated region
      $region17: #{decoder_forward_pallas.1} parent=11 // pred_check
        %p275 = pneg %p84
      $region18: #{decoder_forward_pallas.1} parent=11 // pred_check_branch
        %277 = sbr.rel (%p275) target = $region20
      $region19: #{decoder_forward_pallas.1} parent=11 // pred_region
        _
      $region20: #{decoder_forward_pallas.1} parent=11 // pred_fallthru
        _
      // Predicated region
      $region21: #{decoder_forward_pallas.1} parent=11 // pred_check
        %p278 = pneg %p105
      $region22: #{decoder_forward_pallas.1} parent=11 // pred_check_branch
        %280 = sbr.rel (%p278) target = $region24
      $region23: #{decoder_forward_pallas.1} parent=11 // pred_region
        _
      $region24: #{decoder_forward_pallas.1} parent=11 // pred_fallthru
        _
      // Predicated region
      $region25: #{decoder_forward_pallas.1} parent=11 // pred_check
        %p281 = pneg %p126
      $region26: #{decoder_forward_pallas.1} parent=11 // pred_check_branch
        %283 = sbr.rel (%p281) target = $region28
      $region27: #{decoder_forward_pallas.1} parent=11 // pred_region
        _
      $region28: #{decoder_forward_pallas.1} parent=11 // pred_fallthru
        _
      // Predicated region
      $region29: #{decoder_forward_pallas.1} parent=11 // pred_check
        %p284 = pneg %p147
      $region30: #{decoder_forward_pallas.1} parent=11 // pred_check_branch
        %286 = sbr.rel (%p284) target = $region32
      $region31: #{decoder_forward_pallas.1} parent=11 // pred_region
        _
      $region32: #{decoder_forward_pallas.1} parent=11 // pred_fallthru
        _
      // Predicated region
      $region33: #{decoder_forward_pallas.1} parent=11 // pred_check
        %p287 = pneg %p168
      $region34: #{decoder_forward_pallas.1} parent=11 // pred_check_branch
        %289 = sbr.rel (%p287) target = $region36
      $region35: #{decoder_forward_pallas.1} parent=11 // pred_region
        _
      $region36: #{decoder_forward_pallas.1} parent=11 // pred_fallthru
        _
      // Predicated region
      $region37: #{decoder_forward_pallas.1} parent=11 // pred_check
        %p290 = pneg %p189
      $region38: #{decoder_forward_pallas.1} parent=11 // pred_check_branch
        %292 = sbr.rel (%p290) target = $region40
      $region39: #{decoder_forward_pallas.1} parent=11 // pred_region
        _
      $region40: #{decoder_forward_pallas.1} parent=11 // pred_fallthru
        _
      // Predicated region
      $region41: #{decoder_forward_pallas.1} parent=11 // pred_check
        %p293 = pneg %p210
      $region42: #{decoder_forward_pallas.1} parent=11 // pred_check_branch
        %295 = sbr.rel (%p293) target = $region44
      $region43: #{decoder_forward_pallas.1} parent=11 // pred_region
        _
      $region44: #{decoder_forward_pallas.1} parent=11 // pred_fallthru
        _
      // Predicated region
      $region45: #{decoder_forward_pallas.1} parent=11 // pred_check
        %p296 = pneg %p231
      $region46: #{decoder_forward_pallas.1} parent=11 // pred_check_branch
        %298 = sbr.rel (%p296) target = $region48
      $region47: #{decoder_forward_pallas.1} parent=11 // pred_region
        _
      $region48: #{decoder_forward_pallas.1} parent=11 // pred_fallthru
        _
    $region12: #{decoder_forward_pallas.1} parent=5 // pred_fallthru
      _
    %p299 = scmp.lt.s32.totalorder %s16, 2
    // Predicated region
    $region49: #{decoder_forward_pallas.1} parent=5 // pred_check
      %p300 = pneg %p299
    $region50: #{decoder_forward_pallas.1} parent=5 // pred_check_branch
      %302 = sbr.rel (%p300) target = $region52
    $region51: #{decoder_forward_pallas.1} parent=5 // pred_region
      // Predicated region
      $region53: #{decoder_forward_pallas.1} parent=51 // pred_check
        %p303 = pneg %p36
      $region54: #{decoder_forward_pallas.1} parent=51 // pred_check_branch
        %305 = sbr.rel (%p303) target = $region56
      $region55: #{decoder_forward_pallas.1} parent=51 // pred_region
        %p306 = scmp.lt.s32.totalorder %s16, 1
        %s307 = scalar_select %p306, %s16, 1
        %s308 = smul.addr %s307, 2
        %s309 = smul.addr %s308, 8
        %s310 = scalar_lea.vmem %s0, %s309
      $region56: #{decoder_forward_pallas.1} parent=51 // pred_fallthru
        _
    $region52: #{decoder_forward_pallas.1} parent=5 // pred_fallthru
      _
    %p311 = scmp.le.s32.totalorder 1, %s16
    %p312 = scmp.lt.s32.totalorder %s16, 3
    %p313 = pnand %p311, %p312
    %p314 = pneg %p313
    // Predicated region
    $region57: #{decoder_forward_pallas.1} parent=5 // pred_check
      _
    $region58: #{decoder_forward_pallas.1} parent=5 // pred_check_branch
      %316 = sbr.rel (%p313) target = $region60
    $region59: #{decoder_forward_pallas.1} parent=5 // pred_region
      %s317 = ssub.s32 %s16, 1
      %p318 = scmp.lt.s32.totalorder %s21, 1
      %s319 = scalar_select %p318, %s21, 1
      %s320 = smul.addr %s319, 2
      %s321 = smul.addr %s320, 8
      %s322 = scalar_lea.vmem %s0, %s321
      %p323 = pneg %p42
      %p324 = pneg %p39
      %p325 = pneg %p63
      %p326 = pneg %p60
      %p327 = pneg %p84
      %p328 = pneg %p81
      %p329 = pneg %p105
      %p330 = pneg %p102
      %p331 = pneg %p126
      %p332 = pneg %p123
      %p333 = pneg %p147
      %p334 = pneg %p144
      %p335 = pneg %p168
      %p336 = pneg %p165
      %p337 = pneg %p189
      %p338 = pneg %p186
      %p339 = pneg %p210
      %p340 = pneg %p207
      %p341 = pneg %p231
      %p342 = pneg %p228
      %p343 = pneg %p257
      %p344 = pneg %p254
      %p345 = scmp.lt.s32.totalorder %s21, 1
      %s346 = scalar_select %p345, %s21, 1
      %s347 = smul.addr %s346, 2
      %s348 = smul.addr %s347, 8
      %s349 = scalar_lea.vmem %s10, %s348
      %p350 = scmp.lt.s32.totalorder %s21, 1
      %s351 = scalar_select %p350, %s21, 1
      %s352 = smul.addr %s351, 2
      %s353 = smul.addr %s352, 8
      %s354 = scalar_lea.vmem %s0, %s353
      %p355 = scmp.lt.s32.totalorder %s21, 1
      %s356 = scalar_select %p355, %s21, 1
      %s357 = smul.addr %s356, 2
      %s358 = smul.addr %s357, 8
      %s359 = scalar_lea.vmem %s10, %s358
      %361 = vst [vmem:[#allocation2] sm:$0xf] 0.0
      %362 = vst [vmem:[#allocation2 + $0xc] sm:$0xf] 0.0
      %v363 = vld [vmem:[%s9] sm:$0xf]
      %v364 = vld [vmem:[%s354] sm:$0xff]
      %v365 = vld [vmem:[%s354 + $0x8] sm:$0xff]
      %v366 = vpack.c.bf16 %v364, %v364
      %v367 = vpack.c.bf16 %v365, %v365
      %v368 = vld [vmem:[%s1] sm:$0xf]
      %v369 = vld [vmem:[%s2] sm:$0xff]
      %371 = vset.pattern.permute.xlu0 0
      %372 = vperm.xlu0 %371, %v369
      %v373 = vpop.permute.xlu0 %372
      %vm375 = vcmask 64512
      %v377 = vsel %vm375, %v368, 0
      %vm379 = vcmask 1043456
      %v381 = vsel %vm379, %v366, 0
      %v384 = vsel %vm379, %v367, 0
      %386 = vmatpush.bf16.msra.mxu0 0
      %387 = vmatpush.bf16.msra.mxu0 0
      %388 = vmatpush.bf16.msra.mxu0 0
      %389 = vmatpush.bf16.msra.mxu0 0
      %390 = vmatpush.bf16.msra.mxu0 0
      %391 = vmatpush.bf16.msra.mxu0 0
      %392 = vmatpush.bf16.msra.mxu0 0
      %393 = vmatpush.bf16.msra.mxu0 %v381
      %394 = vmatmul.bf16.gmra.mxu0 %v377
      %v395 = vpop.f32.mrf.mxu0
      %v396 = vadd.f32 %v373, %v395
      %v397 = vpop.f32.mrf.mxu0
      %398 = vdwg.mxu0
      %399 = vmatpush.bf16.msra.mxu0 0
      %400 = vmatpush.bf16.msra.mxu0 0
      %401 = vmatpush.bf16.msra.mxu0 0
      %402 = vmatpush.bf16.msra.mxu0 0
      %403 = vmatpush.bf16.msra.mxu0 0
      %404 = vmatpush.bf16.msra.mxu0 0
      %405 = vmatpush.bf16.msra.mxu0 0
      %406 = vmatpush.bf16.msra.mxu0 %v384
      %407 = vmatmul.bf16.gmra.mxu0 %v377
      %v408 = vpop.f32.mrf.mxu0
      %v409 = vadd.f32 %v373, %v408
      %v410 = vpop.f32.mrf.mxu0
      %411 = vdwg.mxu0
      %v412 = vmax.f32 %v396, 0.0
      %v413 = vmax.f32 %v409, 0.0
      %v414 = vld [vmem:[%s3] sm:$0x3]
      %v415 = vld [vmem:[%s4] sm:$0xf]
      %v418 = vrot.slane %v413, 4
      %v419 = vsel %vm379, %v412, %v418
      %421 = vst [vmem:[#allocation2 + $0x4] sm:$0xff] %v419
      %v422 = vld [vmem:[#allocation2] sm:$0xff]
      %v423 = vld [vmem:[#allocation2 + $0x8] sm:$0xff]
      %v425 = vperm.slane %v363, 0
      %v426 = vperm.slane %v363, 2
      %v429 = vperm.slane %v425, 0
      %v430 = vperm.slane %v426, 0
      %v433 = vrot.slane %v430, 4
      %v434 = vsel %vm379, %v429, %v433
      %435 = vrot.lane.b32.xlu0 %v434, 111
      %v436 = vpop.permute.xlu0 %435
      %v437 = vrot.slane %v436, 4
      %vm438 = vcmask 908288
      %v439 = vsel %vm438, %v437, %v436
      %v442 = vmul.f32 %v422, %v439
      %v443 = vmul.f32 %v423, %v437
      %446 = vst [vmem:[#allocation1] ss:$2 sm:$0xff] %v442
      %s447 = scalar_lea.vmem [#allocation1], 16
      %448 = vst [vmem:[%s447] ss:$2 sm:$0xff] %v443
      %v449 = vld.sshfl [vmem:[#allocation1] sm:$0xff pattern:$0x75316420]
      %v450 = vld.sshfl [vmem:[#allocation1 + $0x8] sm:$0xff pattern:$0x75316420]
      %v451 = vld.sshfl [vmem:[#allocation1 + $0x10] sm:$0xff pattern:$0x75316420]
      %452 = vrot.lane.b32.xlu0 %v449, 17
      %v453 = vpop.permute.xlu0 %452
      %454 = vrot.lane.b32.xlu0 %v450, 17
      %v455 = vpop.permute.xlu0 %454
      %456 = vrot.lane.b32.xlu0 %v451, 17
      %v457 = vpop.permute.xlu0 %456
      %vm458 = vcmask 138240
      %v459 = vsel %vm458, %v453, %v455
      %v460 = vsel %vm458, %v455, %v457
      %463 = vst [vmem:[#allocation3] sm:$0xf] %v459
      %464 = vst [vmem:[#allocation3 + $0x8] sm:$0xf] %v460
      %s467 = scalar_lea.vmem [#allocation1], 1
      %468 = vst [vmem:[%s467] ss:$2 sm:$0xff] %v422
      %s469 = scalar_lea.vmem [#allocation1], 17
      %470 = vst [vmem:[%s469] ss:$2 sm:$0xff] %v423
      %v471 = vld.sshfl [vmem:[#allocation1] sm:$0xff pattern:$0x75316420]
      %v472 = vld.sshfl [vmem:[#allocation1 + $0x8] sm:$0xff pattern:$0x75316420]
      %v473 = vld.sshfl [vmem:[#allocation1 + $0x10] sm:$0xff pattern:$0x75316420]
      %474 = vrot.lane.b32.xlu0 %v471, 16
      %v475 = vpop.permute.xlu0 %474
      %476 = vrot.lane.b32.xlu0 %v472, 16
      %v477 = vpop.permute.xlu0 %476
      %478 = vrot.lane.b32.xlu0 %v473, 16
      %v479 = vpop.permute.xlu0 %478
      %vm480 = vcmask 130048
      %v481 = vsel %vm480, %v475, %v477
      %v482 = vsel %vm480, %v477, %v479
      %485 = vst [vmem:[#allocation3] sm:$0xf0] %v481
      %486 = vst [vmem:[#allocation3 + $0x8] sm:$0xf0] %v482
      %v487 = vperm.slane %v363, 1
      %v488 = vperm.slane %v363, 3
      %v491 = vperm.slane %v487, 1
      %v492 = vperm.slane %v488, 1
      %v495 = vrot.slane %v492, 4
      %v496 = vsel %vm379, %v491, %v495
      %497 = vrot.lane.b32.xlu0 %v496, 113
      %v498 = vpop.permute.xlu0 %497
      %v499 = vrot.slane %v498, 4
      %vm500 = vcmask 924672
      %v501 = vsel %vm500, %v499, %v498
      %v504 = vmul.f32 %v422, %v501
      %v505 = vmul.f32 %v423, %v499
      %508 = vst [vmem:[#allocation1] ss:$2 sm:$0xff] %v504
      %s509 = scalar_lea.vmem [#allocation1], 16
      %510 = vst [vmem:[%s509] ss:$2 sm:$0xff] %v505
      %v511 = vld.sshfl [vmem:[#allocation1] sm:$0xff pattern:$0x75316420]
      %v512 = vld.sshfl [vmem:[#allocation1 + $0x8] sm:$0xff pattern:$0x75316420]
      %v513 = vld.sshfl [vmem:[#allocation1 + $0x10] sm:$0xff pattern:$0x75316420]
      %514 = vrot.lane.b32.xlu0 %v511, 15
      %v515 = vpop.permute.xlu0 %514
      %516 = vrot.lane.b32.xlu0 %v512, 15
      %v517 = vpop.permute.xlu0 %516
      %518 = vrot.lane.b32.xlu0 %v513, 15
      %v519 = vpop.permute.xlu0 %518
      %vm520 = vcmask 121856
      %v521 = vsel %vm520, %v515, %v517
      %v522 = vsel %vm520, %v517, %v519
      %525 = vst [vmem:[#allocation3 + $0x10] sm:$0xf] %v521
      %526 = vst [vmem:[#allocation3 + $0x18] sm:$0xf] %v522
      %527 = vrot.lane.b32.xlu0 %v434, 127
      %v528 = vpop.permute.xlu0 %527
      %v529 = vrot.slane %v528, 4
      %vm530 = vcmask 1039360
      %v531 = vsel %vm530, %v529, %v528
      %v534 = vmul.f32 %v422, %v531
      %v535 = vmul.f32 %v423, %v529
      %s538 = scalar_lea.vmem [#allocation1], 1
      %539 = vst [vmem:[%s538] ss:$2 sm:$0xff] %v534
      %s540 = scalar_lea.vmem [#allocation1], 17
      %541 = vst [vmem:[%s540] ss:$2 sm:$0xff] %v535
      %v542 = vld.sshfl [vmem:[#allocation1] sm:$0xff pattern:$0x75316420]
      %v543 = vld.sshfl [vmem:[#allocation1 + $0x8] sm:$0xff pattern:$0x75316420]
      %v544 = vld.sshfl [vmem:[#allocation1 + $0x10] sm:$0xff pattern:$0x75316420]
      %545 = vrot.lane.b32.xlu0 %v542, 1
      %v546 = vpop.permute.xlu0 %545
      %547 = vrot.lane.b32.xlu0 %v543, 1
      %v548 = vpop.permute.xlu0 %547
      %549 = vrot.lane.b32.xlu0 %v544, 1
      %v550 = vpop.permute.xlu0 %549
      %vm551 = vcmask 7168
      %v552 = vsel %vm551, %v546, %v548
      %v553 = vsel %vm551, %v548, %v550
      %556 = vst [vmem:[#allocation3 + $0x10] sm:$0xf0] %v552
      %557 = vst [vmem:[#allocation3 + $0x18] sm:$0xf0] %v553
      %558 = vst [vmem:[#allocation1] ss:$2 sm:$0xff] %v422
      %s559 = scalar_lea.vmem [#allocation1], 16
      %560 = vst [vmem:[%s559] ss:$2 sm:$0xff] %v423
      %v561 = vld.sshfl [vmem:[#allocation1 + $0x8] sm:$0xff pattern:$0x75316420]
      %v562 = vld.sshfl [vmem:[#allocation1 + $0x10] sm:$0xff pattern:$0x75316420]
      %565 = vst [vmem:[#allocation3 + $0x20] sm:$0xf] %v561
      %566 = vst [vmem:[#allocation3 + $0x28] sm:$0xf] %v562
      %567 = vrot.lane.b32.xlu0 %v422, 127
      %v568 = vpop.permute.xlu0 %567
      %569 = vrot.lane.b32.xlu0 %v423, 127
      %v570 = vpop.permute.xlu0 %569
      %v571 = vrot.slane %v568, 4
      %v572 = vrot.slane %v570, 4
      %v573 = vsel %vm379, %v571, %v572
      %v574 = vsel %vm530, %v573, %v570
      %v577 = vmul.f32 %v574, %v496
      %s579 = scalar_lea.vmem [#allocation1], 1
      %580 = vst [vmem:[%s579] ss:$2 sm:$0xff] %v577
      %v581 = vld.sshfl [vmem:[#allocation1] sm:$0xff pattern:$0x75316420]
      %v582 = vld.sshfl [vmem:[#allocation1 + $0x8] sm:$0xff pattern:$0x75316420]
      %585 = vst [vmem:[#allocation3 + $0x20] sm:$0xf0] %v581
      %586 = vst [vmem:[#allocation3 + $0x28] sm:$0xf0] %v582
      %587 = vrot.lane.b32.xlu0 %v422, 113
      %v588 = vpop.permute.xlu0 %587
      %589 = vrot.lane.b32.xlu0 %v423, 113
      %v590 = vpop.permute.xlu0 %589
      %v591 = vrot.slane %v588, 4
      %v592 = vrot.slane %v590, 4
      %v593 = vsel %vm379, %v591, %v592
      %v594 = vsel %vm500, %v593, %v590
      %v597 = vmul.f32 %v594, %v434
      %599 = vst [vmem:[#allocation1] ss:$2 sm:$0xff] %v597
      %v600 = vld.sshfl [vmem:[#allocation1] sm:$0xff pattern:$0x75316420]
      %v601 = vld.sshfl [vmem:[#allocation1 + $0x8] sm:$0xff pattern:$0x75316420]
      %604 = vst [vmem:[#allocation3 + $0x30] sm:$0xf] %v600
      %605 = vst [vmem:[#allocation3 + $0x38] sm:$0xf] %v601
      %s606 = scalar_lea.vmem [#allocation1], 1
      %607 = vst [vmem:[%s606] ss:$2 sm:$0xff] %v422
      %s608 = scalar_lea.vmem [#allocation1], 17
      %609 = vst [vmem:[%s608] ss:$2 sm:$0xff] %v423
      %v610 = vld.sshfl [vmem:[#allocation1 + $0x8] sm:$0xff pattern:$0x75316420]
      %v611 = vld.sshfl [vmem:[#allocation1 + $0x10] sm:$0xff pattern:$0x75316420]
      %v612 = vld.sshfl [vmem:[#allocation1 + $0x18] sm:$0xff pattern:$0x75316420]
      %613 = vrot.lane.b32.xlu0 %v610, 112
      %v614 = vpop.permute.xlu0 %613
      %615 = vrot.lane.b32.xlu0 %v611, 112
      %v616 = vpop.permute.xlu0 %615
      %617 = vrot.lane.b32.xlu0 %v612, 112
      %v618 = vpop.permute.xlu0 %617
      %vm619 = vcmask 916480
      %v620 = vsel %vm619, %v614, %v616
      %v621 = vsel %vm619, %v616, %v618
      %624 = vst [vmem:[#allocation3 + $0x30] sm:$0xf0] %v620
      %625 = vst [vmem:[#allocation3 + $0x38] sm:$0xf0] %v621
      %626 = vrot.lane.b32.xlu0 %v422, 111
      %v627 = vpop.permute.xlu0 %626
      %628 = vrot.lane.b32.xlu0 %v423, 111
      %v629 = vpop.permute.xlu0 %628
      %v630 = vrot.slane %v627, 4
      %v631 = vrot.slane %v629, 4
      %v632 = vsel %vm379, %v630, %v631
      %v633 = vsel %vm438, %v632, %v629
      %v635 = vmul.f32 %v633, %v496
      %637 = vst [vmem:[#allocation1] ss:$2 sm:$0xff] %v635
      %v638 = vld.sshfl [vmem:[#allocation1] sm:$0xff pattern:$0x75316420]
      %v639 = vld.sshfl [vmem:[#allocation1 + $0x8] sm:$0xff pattern:$0x75316420]
      %642 = vst [vmem:[#allocation3 + $0x40] sm:$0xf] %v638
      %643 = vst [vmem:[#allocation3 + $0x48] sm:$0xf] %v639
      %v644 = vld [vmem:[#allocation3] sm:$0xff]
      %v645 = vld [vmem:[#allocation3 + $0x8] sm:$0xff]
      %v646 = vld [vmem:[#allocation3 + $0x10] sm:$0xff]
      %v647 = vld [vmem:[#allocation3 + $0x18] sm:$0xff]
      %v648 = vld [vmem:[#allocation3 + $0x20] sm:$0xff]
      %v649 = vld [vmem:[#allocation3 + $0x28] sm:$0xff]
      %v650 = vld [vmem:[#allocation3 + $0x30] sm:$0xff]
      %v651 = vld [vmem:[#allocation3 + $0x38] sm:$0xff]
      %v652 = vld [vmem:[#allocation3 + $0x40] sm:$0xf]
      %v653 = vld [vmem:[#allocation3 + $0x48] sm:$0xf]
      %v654 = vpack.c.bf16 %v646, %v644
      %v655 = vpack.c.bf16 %v647, %v645
      %v656 = vpack.c.bf16 %v650, %v648
      %v657 = vpack.c.bf16 %v651, %v649
      %v658 = vpack.c.bf16 %v652, %v652
      %v659 = vpack.c.bf16 %v653, %v653
      %661 = vset.pattern.permute.xlu0 0
      %662 = vperm.xlu0 %661, %v415
      %v663 = vpop.permute.xlu0 %662
      %vm665 = vcmask 293888
      %v667 = vsel %vm665, %v414, 0
      %vm669 = vcmask 1041408
      %v671 = vsel %vm669, %v658, 0
      %v674 = vsel %vm669, %v659, 0
      %676 = vmatpush.bf16.msra.mxu0 0
      %677 = vmatpush.bf16.msra.mxu0 0
      %678 = vmatpush.bf16.msra.mxu0 0
      %679 = vmatpush.bf16.msra.mxu0 0
      %680 = vmatpush.bf16.msra.mxu0 0
      %681 = vmatpush.bf16.msra.mxu0 %v671
      %682 = vmatpush.bf16.msra.mxu0 %v656
      %683 = vmatpush.bf16.msra.mxu0 %v654
      %684 = vmatmul.bf16.gmra.mxu0 %v667
      %v685 = vpop.f32.mrf.mxu0
      %v686 = vadd.f32 %v663, %v685
      %v687 = vpop.f32.mrf.mxu0
      %688 = vdwg.mxu0
      %689 = vmatpush.bf16.msra.mxu0 0
      %690 = vmatpush.bf16.msra.mxu0 0
      %691 = vmatpush.bf16.msra.mxu0 0
      %692 = vmatpush.bf16.msra.mxu0 0
      %693 = vmatpush.bf16.msra.mxu0 0
      %694 = vmatpush.bf16.msra.mxu0 %v674
      %695 = vmatpush.bf16.msra.mxu0 %v657
      %696 = vmatpush.bf16.msra.mxu0 %v655
      %697 = vmatmul.bf16.gmra.mxu0 %v667
      %v698 = vpop.f32.mrf.mxu0
      %v699 = vadd.f32 %v663, %v698
      %v700 = vpop.f32.mrf.mxu0
      %701 = vdwg.mxu0
      %v702 = vmax.f32 %v686, 0.0
      %v703 = vmax.f32 %v699, 0.0
      %v704 = vld [vmem:[%s5] sm:$0x3]
      %v705 = vld [vmem:[%s6] sm:$0xf]
      %v708 = vrot.slane %v703, 4
      %v709 = vsel %vm379, %v702, %v708
      %711 = vst [vmem:[#allocation2 + $0x4] sm:$0xff] %v709
      %v712 = vld [vmem:[#allocation2] sm:$0xff]
      %v713 = vld [vmem:[#allocation2 + $0x8] sm:$0xff]
      %v714 = vmul.f32 %v712, %v439
      %v715 = vmul.f32 %v713, %v437
      %718 = vst [vmem:[#allocation1] ss:$2 sm:$0xff] %v714
      %s719 = scalar_lea.vmem [#allocation1], 16
      %720 = vst [vmem:[%s719] ss:$2 sm:$0xff] %v715
      %v721 = vld.sshfl [vmem:[#allocation1] sm:$0xff pattern:$0x75316420]
      %v722 = vld.sshfl [vmem:[#allocation1 + $0x8] sm:$0xff pattern:$0x75316420]
      %v723 = vld.sshfl [vmem:[#allocation1 + $0x10] sm:$0xff pattern:$0x75316420]
      %724 = vrot.lane.b32.xlu0 %v721, 17
      %v725 = vpop.permute.xlu0 %724
      %726 = vrot.lane.b32.xlu0 %v722, 17
      %v727 = vpop.permute.xlu0 %726
      %728 = vrot.lane.b32.xlu0 %v723, 17
      %v729 = vpop.permute.xlu0 %728
      %v730 = vsel %vm458, %v725, %v727
      %v731 = vsel %vm458, %v727, %v729
      %734 = vst [vmem:[#allocation3] sm:$0xf] %v730
      %735 = vst [vmem:[#allocation3 + $0x8] sm:$0xf] %v731
      %s738 = scalar_lea.vmem [#allocation1], 1
      %739 = vst [vmem:[%s738] ss:$2 sm:$0xff] %v712
      %s740 = scalar_lea.vmem [#allocation1], 17
      %741 = vst [vmem:[%s740] ss:$2 sm:$0xff] %v713
      %v742 = vld.sshfl [vmem:[#allocation1] sm:$0xff pattern:$0x75316420]
      %v743 = vld.sshfl [vmem:[#allocation1 + $0x8] sm:$0xff pattern:$0x75316420]
      %v744 = vld.sshfl [vmem:[#allocation1 + $0x10] sm:$0xff pattern:$0x75316420]
      %745 = vrot.lane.b32.xlu0 %v742, 16
      %v746 = vpop.permute.xlu0 %745
      %747 = vrot.lane.b32.xlu0 %v743, 16
      %v748 = vpop.permute.xlu0 %747
      %749 = vrot.lane.b32.xlu0 %v744, 16
      %v750 = vpop.permute.xlu0 %749
      %v751 = vsel %vm480, %v746, %v748
      %v752 = vsel %vm480, %v748, %v750
      %755 = vst [vmem:[#allocation3] sm:$0xf0] %v751
      %756 = vst [vmem:[#allocation3 + $0x8] sm:$0xf0] %v752
      %v757 = vmul.f32 %v712, %v501
      %v758 = vmul.f32 %v713, %v499
      %761 = vst [vmem:[#allocation1] ss:$2 sm:$0xff] %v757
      %s762 = scalar_lea.vmem [#allocation1], 16
      %763 = vst [vmem:[%s762] ss:$2 sm:$0xff] %v758
      %v764 = vld.sshfl [vmem:[#allocation1] sm:$0xff pattern:$0x75316420]
      %v765 = vld.sshfl [vmem:[#allocation1 + $0x8] sm:$0xff pattern:$0x75316420]
      %v766 = vld.sshfl [vmem:[#allocation1 + $0x10] sm:$0xff pattern:$0x75316420]
      %767 = vrot.lane.b32.xlu0 %v764, 15
      %v768 = vpop.permute.xlu0 %767
      %769 = vrot.lane.b32.xlu0 %v765, 15
      %v770 = vpop.permute.xlu0 %769
      %771 = vrot.lane.b32.xlu0 %v766, 15
      %v772 = vpop.permute.xlu0 %771
      %v773 = vsel %vm520, %v768, %v770
      %v774 = vsel %vm520, %v770, %v772
      %777 = vst [vmem:[#allocation3 + $0x10] sm:$0xf] %v773
      %778 = vst [vmem:[#allocation3 + $0x18] sm:$0xf] %v774
      %v779 = vmul.f32 %v712, %v531
      %v780 = vmul.f32 %v713, %v529
      %s783 = scalar_lea.vmem [#allocation1], 1
      %784 = vst [vmem:[%s783] ss:$2 sm:$0xff] %v779
      %s785 = scalar_lea.vmem [#allocation1], 17
      %786 = vst [vmem:[%s785] ss:$2 sm:$0xff] %v780
      %v787 = vld.sshfl [vmem:[#allocation1] sm:$0xff pattern:$0x75316420]
      %v788 = vld.sshfl [vmem:[#allocation1 + $0x8] sm:$0xff pattern:$0x75316420]
      %v789 = vld.sshfl [vmem:[#allocation1 + $0x10] sm:$0xff pattern:$0x75316420]
      %790 = vrot.lane.b32.xlu0 %v787, 1
      %v791 = vpop.permute.xlu0 %790
      %792 = vrot.lane.b32.xlu0 %v788, 1
      %v793 = vpop.permute.xlu0 %792
      %794 = vrot.lane.b32.xlu0 %v789, 1
      %v795 = vpop.permute.xlu0 %794
      %v796 = vsel %vm551, %v791, %v793
      %v797 = vsel %vm551, %v793, %v795
      %800 = vst [vmem:[#allocation3 + $0x10] sm:$0xf0] %v796
      %801 = vst [vmem:[#allocation3 + $0x18] sm:$0xf0] %v797
      %802 = vst [vmem:[#allocation1] ss:$2 sm:$0xff] %v712
      %s803 = scalar_lea.vmem [#allocation1], 16
      %804 = vst [vmem:[%s803] ss:$2 sm:$0xff] %v713
      %v805 = vld.sshfl [vmem:[#allocation1 + $0x8] sm:$0xff pattern:$0x75316420]
      %v806 = vld.sshfl [vmem:[#allocation1 + $0x10] sm:$0xff pattern:$0x75316420]
      %809 = vst [vmem:[#allocation3 + $0x20] sm:$0xf] %v805
      %810 = vst [vmem:[#allocation3 + $0x28] sm:$0xf] %v806
      %811 = vrot.lane.b32.xlu0 %v712, 127
      %v812 = vpop.permute.xlu0 %811
      %813 = vrot.lane.b32.xlu0 %v713, 127
      %v814 = vpop.permute.xlu0 %813
      %v815 = vrot.slane %v812, 4
      %v816 = vrot.slane %v814, 4
      %v817 = vsel %vm379, %v815, %v816
      %v818 = vsel %vm530, %v817, %v814
      %v820 = vmul.f32 %v818, %v496
      %s822 = scalar_lea.vmem [#allocation1], 1
      %823 = vst [vmem:[%s822] ss:$2 sm:$0xff] %v820
      %v824 = vld.sshfl [vmem:[#allocation1] sm:$0xff pattern:$0x75316420]
      %v825 = vld.sshfl [vmem:[#allocation1 + $0x8] sm:$0xff pattern:$0x75316420]
      %828 = vst [vmem:[#allocation3 + $0x20] sm:$0xf0] %v824
      %829 = vst [vmem:[#allocation3 + $0x28] sm:$0xf0] %v825
      %830 = vrot.lane.b32.xlu0 %v712, 113
      %v831 = vpop.permute.xlu0 %830
      %832 = vrot.lane.b32.xlu0 %v713, 113
      %v833 = vpop.permute.xlu0 %832
      %v834 = vrot.slane %v831, 4
      %v835 = vrot.slane %v833, 4
      %v836 = vsel %vm379, %v834, %v835
      %v837 = vsel %vm500, %v836, %v833
      %v839 = vmul.f32 %v837, %v434
      %841 = vst [vmem:[#allocation1] ss:$2 sm:$0xff] %v839
      %v842 = vld.sshfl [vmem:[#allocation1] sm:$0xff pattern:$0x75316420]
      %v843 = vld.sshfl [vmem:[#allocation1 + $0x8] sm:$0xff pattern:$0x75316420]
      %846 = vst [vmem:[#allocation3 + $0x30] sm:$0xf] %v842
      %847 = vst [vmem:[#allocation3 + $0x38] sm:$0xf] %v843
      %s848 = scalar_lea.vmem [#allocation1], 1
      %849 = vst [vmem:[%s848] ss:$2 sm:$0xff] %v712
      %s850 = scalar_lea.vmem [#allocation1], 17
      %851 = vst [vmem:[%s850] ss:$2 sm:$0xff] %v713
      %v852 = vld.sshfl [vmem:[#allocation1 + $0x8] sm:$0xff pattern:$0x75316420]
      %v853 = vld.sshfl [vmem:[#allocation1 + $0x10] sm:$0xff pattern:$0x75316420]
      %v854 = vld.sshfl [vmem:[#allocation1 + $0x18] sm:$0xff pattern:$0x75316420]
      %855 = vrot.lane.b32.xlu0 %v852, 112
      %v856 = vpop.permute.xlu0 %855
      %857 = vrot.lane.b32.xlu0 %v853, 112
      %v858 = vpop.permute.xlu0 %857
      %859 = vrot.lane.b32.xlu0 %v854, 112
      %v860 = vpop.permute.xlu0 %859
      %v861 = vsel %vm619, %v856, %v858
      %v862 = vsel %vm619, %v858, %v860
      %865 = vst [vmem:[#allocation3 + $0x30] sm:$0xf0] %v861
      %866 = vst [vmem:[#allocation3 + $0x38] sm:$0xf0] %v862
      %867 = vrot.lane.b32.xlu0 %v712, 111
      %v868 = vpop.permute.xlu0 %867
      %869 = vrot.lane.b32.xlu0 %v713, 111
      %v870 = vpop.permute.xlu0 %869
      %v871 = vrot.slane %v868, 4
      %v872 = vrot.slane %v870, 4
      %v873 = vsel %vm379, %v871, %v872
      %v874 = vsel %vm438, %v873, %v870
      %v876 = vmul.f32 %v874, %v496
      %878 = vst [vmem:[#allocation1] ss:$2 sm:$0xff] %v876
      %v879 = vld.sshfl [vmem:[#allocation1] sm:$0xff pattern:$0x75316420]
      %v880 = vld.sshfl [vmem:[#allocation1 + $0x8] sm:$0xff pattern:$0x75316420]
      %883 = vst [vmem:[#allocation3 + $0x40] sm:$0xf] %v879
      %884 = vst [vmem:[#allocation3 + $0x48] sm:$0xf] %v880
      %v885 = vld [vmem:[#allocation3] sm:$0xff]
      %v886 = vld [vmem:[#allocation3 + $0x8] sm:$0xff]
      %v887 = vld [vmem:[#allocation3 + $0x10] sm:$0xff]
      %v888 = vld [vmem:[#allocation3 + $0x18] sm:$0xff]
      %v889 = vld [vmem:[#allocation3 + $0x20] sm:$0xff]
      %v890 = vld [vmem:[#allocation3 + $0x28] sm:$0xff]
      %v891 = vld [vmem:[#allocation3 + $0x30] sm:$0xff]
      %v892 = vld [vmem:[#allocation3 + $0x38] sm:$0xff]
      %v893 = vld [vmem:[#allocation3 + $0x40] sm:$0xf]
      %v894 = vld [vmem:[#allocation3 + $0x48] sm:$0xf]
      %v895 = vpack.c.bf16 %v887, %v885
      %v896 = vpack.c.bf16 %v888, %v886
      %v897 = vpack.c.bf16 %v891, %v889
      %v898 = vpack.c.bf16 %v892, %v890
      %v899 = vpack.c.bf16 %v893, %v893
      %v900 = vpack.c.bf16 %v894, %v894
      %902 = vset.pattern.permute.xlu0 0
      %903 = vperm.xlu0 %902, %v705
      %v904 = vpop.permute.xlu0 %903
      %v907 = vsel %vm665, %v704, 0
      %v910 = vsel %vm669, %v899, 0
      %v913 = vsel %vm669, %v900, 0
      %915 = vmatpush.bf16.msra.mxu0 0
      %916 = vmatpush.bf16.msra.mxu0 0
      %917 = vmatpush.bf16.msra.mxu0 0
      %918 = vmatpush.bf16.msra.mxu0 0
      %919 = vmatpush.bf16.msra.mxu0 0
      %920 = vmatpush.bf16.msra.mxu0 %v910
      %921 = vmatpush.bf16.msra.mxu0 %v897
      %922 = vmatpush.bf16.msra.mxu0 %v895
      %923 = vmatmul.bf16.gmra.mxu0 %v907
      %v924 = vpop.f32.mrf.mxu0
      %v925 = vadd.f32 %v904, %v924
      %v926 = vpop.f32.mrf.mxu0
      %927 = vdwg.mxu0
      %928 = vmatpush.bf16.msra.mxu0 0
      %929 = vmatpush.bf16.msra.mxu0 0
      %930 = vmatpush.bf16.msra.mxu0 0
      %931 = vmatpush.bf16.msra.mxu0 0
      %932 = vmatpush.bf16.msra.mxu0 0
      %933 = vmatpush.bf16.msra.mxu0 %v913
      %934 = vmatpush.bf16.msra.mxu0 %v898
      %935 = vmatpush.bf16.msra.mxu0 %v896
      %936 = vmatmul.bf16.gmra.mxu0 %v907
      %v937 = vpop.f32.mrf.mxu0
      %v938 = vadd.f32 %v904, %v937
      %v939 = vpop.f32.mrf.mxu0
      %940 = vdwg.mxu0
      %v941 = vmax.f32 %v925, 0.0
      %v942 = vmax.f32 %v938, 0.0
      %v943 = vadd.f32 %v412, %v941
      %v944 = vadd.f32 %v413, %v942
      %v945 = vld [vmem:[%s7] sm:$0xf]
      %v946 = vpack.c.bf16 %v943, %v943
      %v947 = vpack.c.bf16 %v944, %v944
      %v948 = vpack.c.bf16 %v412, %v412
      %v949 = vpack.c.bf16 %v413, %v413
      %v951 = vunpack.c.l.b16 %v945
      %v952 = vpack.c.b16 %v951, %v951
      %953 = vrot.lane.b32.xlu0 %v952, 124
      %v954 = vpop.permute.xlu0 %953
      %v957 = vrot.slane %v948, 2
      %v958 = vrot.slane %v949, 2
      %vm959 = vcmask 31744
      %v961 = vsel %vm959, %v954, 0
      %v964 = vsel %vm669, %v957, 0
      %v967 = vsel %vm669, %v958, 0
      %969 = vmatpush.bf16.msra.mxu0 0
      %970 = vmatpush.bf16.msra.mxu0 0
      %971 = vmatpush.bf16.msra.mxu0 0
      %972 = vmatpush.bf16.msra.mxu0 0
      %973 = vmatpush.bf16.msra.mxu0 0
      %974 = vmatpush.bf16.msra.mxu0 0
      %975 = vmatpush.bf16.msra.mxu0 0
      %976 = vmatpush.bf16.msra.mxu0 %v964
      %977 = vmatmul.bf16.gmra.mxu0 %v961
      %v978 = vpop.f32.mrf.mxu0
      %v979 = vadd.f32 0.0, %v978
      %v980 = vpop.f32.mrf.mxu0
      %981 = vdwg.mxu0
      %982 = vmatpush.bf16.msra.mxu0 0
      %983 = vmatpush.bf16.msra.mxu0 0
      %984 = vmatpush.bf16.msra.mxu0 0
      %985 = vmatpush.bf16.msra.mxu0 0
      %986 = vmatpush.bf16.msra.mxu0 0
      %987 = vmatpush.bf16.msra.mxu0 0
      %988 = vmatpush.bf16.msra.mxu0 0
      %989 = vmatpush.bf16.msra.mxu0 %v967
      %990 = vmatmul.bf16.gmra.mxu0 %v961
      %v991 = vpop.f32.mrf.mxu0
      %v992 = vadd.f32 0.0, %v991
      %v993 = vpop.f32.mrf.mxu0
      %994 = vdwg.mxu0
      %v996 = vsel %vm959, %v945, 0
      %v999 = vsel %vm669, %v946, 0
      %v1002 = vsel %vm669, %v947, 0
      %1004 = vmatpush.bf16.msra.mxu0 0
      %1005 = vmatpush.bf16.msra.mxu0 0
      %1006 = vmatpush.bf16.msra.mxu0 0
      %1007 = vmatpush.bf16.msra.mxu0 0
      %1008 = vmatpush.bf16.msra.mxu0 0
      %1009 = vmatpush.bf16.msra.mxu0 0
      %1010 = vmatpush.bf16.msra.mxu0 0
      %1011 = vmatpush.bf16.msra.mxu0 %v999
      %1012 = vmatmul.bf16.gmra.mxu0 %v996
      %v1013 = vpop.f32.mrf.mxu0
      %v1014 = vadd.f32 %v979, %v1013
      %v1015 = vpop.f32.mrf.mxu0
      %1016 = vdwg.mxu0
      %1017 = vmatpush.bf16.msra.mxu0 0
      %1018 = vmatpush.bf16.msra.mxu0 0
      %1019 = vmatpush.bf16.msra.mxu0 0
      %1020 = vmatpush.bf16.msra.mxu0 0
      %1021 = vmatpush.bf16.msra.mxu0 0
      %1022 = vmatpush.bf16.msra.mxu0 0
      %1023 = vmatpush.bf16.msra.mxu0 0
      %1024 = vmatpush.bf16.msra.mxu0 %v1002
      %1025 = vmatmul.bf16.gmra.mxu0 %v996
      %v1026 = vpop.f32.mrf.mxu0
      %v1027 = vadd.f32 %v992, %v1026
      %v1028 = vpop.f32.mrf.mxu0
      %1029 = vdwg.mxu0
      %v1030 = vld [vmem:[%s8] sm:$0xff]
      %1032 = vset.pattern.permute.xlu0 0
      %1033 = vperm.xlu0 %1032, %v1030
      %v1034 = vpop.permute.xlu0 %1033
      %v1036 = vadd.f32 %v1014, %v1034
      %v1037 = vadd.f32 %v1027, %v1034
      %v1038 = vmax.f32 %v1036, 0.0
      %v1039 = vmax.f32 %v1037, 0.0
      %1040 = vst [vmem:[%s359] sm:$0xff] %v1038
      %1041 = vst [vmem:[%s359 + $0x8] sm:$0xff] %v1039
      %p1042 = scmp.lt.s32.totalorder %s21, 1
      %s1043 = scalar_select %p1042, %s21, 1
      %s1044 = smul.addr %s1043, 2
      %s1045 = smul.addr %s1044, 8
      %s1046 = scalar_lea.vmem %s10, %s1045
      // Predicated region
      $region61: #{decoder_forward_pallas.1} parent=59 // pred_check
        %p1047 = pneg %p254
      $region62: #{decoder_forward_pallas.1} parent=59 // pred_check_branch
        %1049 = sbr.rel (%p1047) target = $region64
      $region63: #{decoder_forward_pallas.1} parent=59 // pred_region
        _
      $region64: #{decoder_forward_pallas.1} parent=59 // pred_fallthru
        _
    $region60: #{decoder_forward_pallas.1} parent=5 // pred_fallthru
      _
    %p1050 = scmp.le.s32.totalorder 2, %s16
    // Predicated region
    $region65: #{decoder_forward_pallas.1} parent=5 // pred_check
      %p1051 = pneg %p1050
    $region66: #{decoder_forward_pallas.1} parent=5 // pred_check_branch
      %1053 = sbr.rel (%p1051) target = $region68
    $region67: #{decoder_forward_pallas.1} parent=5 // pred_region
      %s1054 = ssub.s32 %s16, 2
      // Predicated region
      $region69: #{decoder_forward_pallas.1} parent=67 // pred_check
        %p1055 = pneg %p260
      $region70: #{decoder_forward_pallas.1} parent=67 // pred_check_branch
        %1057 = sbr.rel (%p1055) target = $region72
      $region71: #{decoder_forward_pallas.1} parent=67 // pred_region
        %p1058 = scmp.lt.s32.totalorder %s22, 1
        %s1059 = scalar_select %p1058, %s22, 1
        %s1060 = smul.addr %s1059, 2
        %s1061 = smul.addr %s1060, 8
        %s1062 = scalar_lea.vmem %s10, %s1061
      $region72: #{decoder_forward_pallas.1} parent=67 // pred_fallthru
        _
    $region68: #{decoder_forward_pallas.1} parent=5 // pred_fallthru
      _
  $region6: #{decoder_forward_pallas.1} parent=0 // loop_footer
    %s20 = sadd.s32 1, %s16
  $region7: #{decoder_forward_pallas.1} parent=0 // loop_footer_branch
    %15 = sbr.rel target = $region3
  $region8: #{decoder_forward_pallas.1} parent=0 // loop_exit
    _

</llo_original>
